<compile_context>
chip_gen: v6e
topology: v6e:2x2x1
jax: 0.10.0
libtpu: 0.0.40
codegen_flags: <defaults>
</compile_context>

<pallas_src>
import jax
import jax.numpy as jnp
from jax.experimental import pallas as pl
from jax.experimental.pallas import tpu as pltpu


def textrnn_kernel(tok_ref, fused_ref, whh_ref, fcw_ref, fcb_ref, out_ref, hid_ref):
    """Fused embedding-gather + LSTM recurrence + FC, one invocation.

    tok_ref   : SMEM (T, B)     int32 token ids (time-major, module input layout)
    fused_ref : VMEM (V, 1, 4H) f32  fused table: emb_table @ W_ih + (b_ih + b_hh)
    whh_ref   : VMEM (H, 4H)    hidden->gates weight (pre-transposed)
    fcw_ref   : VMEM (H, Cp)    fc weight (pre-transposed, lane-padded)
    fcb_ref   : VMEM (1, Cp)    fc bias (lane-padded)
    out_ref   : VMEM (Bp, Cp)   logits (batch- and lane-padded)
    hid_ref   : VMEM (Bp, H)    last hidden state (batch-padded)
    """
    T, B = tok_ref.shape
    H, G = whh_ref.shape                      # G == 4 * H
    Bp = hid_ref.shape[0]

    # Hoisted loop invariants (JAX does not CSE broadcasts; load W_hh exactly once).
    whh = whh_ref[...]                                            # (H, 4H)
    sub_iota = jax.lax.broadcasted_iota(jnp.int32, (Bp, G), 0)
    row_masks = [sub_iota == b for b in range(B)]                 # static sublane masks
    gx_zero = jnp.zeros((Bp, G), jnp.float32)

    def step(t, carry):
        h, c = carry
        # Gather this step's pre-projected inputs (embedding ∘ input-proj ∘ +bias),
        # one fused-table row per real batch element.  No dependence on the carry,
        # so it stays off the serial critical path.  Padded batch rows stay zero
        # (their outputs are sliced off in the wrapper).
        gx = gx_zero
        for b in range(B):                                        # static, tiny
            row = fused_ref[tok_ref[t, b]]                        # (1, 4H) dynamic row
            gx = jnp.where(row_masks[b], jnp.broadcast_to(row, (Bp, G)), gx)

        gates = gx + jnp.dot(h, whh, preferred_element_type=jnp.float32)   # (Bp, 4H)
        # Two full-vreg EUP passes instead of four 32-lane sliced ones.
        sig = jax.nn.sigmoid(gates)
        tnh = jnp.tanh(gates)
        i_g = sig[:, 0 * H:1 * H]
        f_g = sig[:, 1 * H:2 * H]
        g_g = tnh[:, 2 * H:3 * H]
        o_g = sig[:, 3 * H:4 * H]
        c_new = f_g * c + i_g * g_g
        h_new = o_g * jnp.tanh(c_new)
        return h_new, c_new

    h0 = jnp.zeros((Bp, H), jnp.float32)
    c0 = jnp.zeros((Bp, H), jnp.float32)
    # Fully-unrolled recurrence: the scheduler sees the whole serial chain at once.
    h, _ = jax.lax.fori_loop(0, T, step, (h0, c0), unroll=True)

    hid_ref[...] = h
    # Lane-padded FC output -> full-width unmasked store.
    out_ref[...] = (jnp.dot(h, fcw_ref[...], preferred_element_type=jnp.float32)
                    + fcb_ref[...])


@jax.jit
def text_rnn_forward(x_tokens, emb_table, w_ih, w_hh, b_gates, fc_w, fc_b):
    """x_tokens: (T, B) int token ids.  Returns (out (B, C), hidden (B, H))."""
    T, B = x_tokens.shape
    V, _ = emb_table.shape
    H = w_hh.shape[0]
    G = 4 * H
    C = fc_w.shape[1]
    Bp = ((B + 7) // 8) * 8                   # batch padded to sublane multiple
    Cp = ((C + 127) // 128) * 128             # fc output padded to lane multiple

    # Weight-only preprocessing (no activation-sized intermediates):
    # Embedding and the LSTM input projection fold algebraically.
    fused = emb_table @ w_ih + b_gates                  # (V, 4H)
    fused3 = fused[:, None, :]                          # (V, 1, 4H): leading-axis gather
    fc_w_p = jnp.pad(fc_w, ((0, 0), (0, Cp - C)))
    fc_b_p = jnp.pad(fc_b, ((0, 0), (0, Cp - C)))

    cost = pl.CostEstimate(
        flops=int(2 * T * Bp * H * G + 2 * Bp * H * Cp + 10 * T * Bp * G),
        transcendentals=int(T * Bp * (2 * G + H)),
        bytes_accessed=int(4 * (T * B + V * G + H * G + H * Cp + Cp + Bp * Cp + Bp * H)),
    )

    out_p, hid_p = pl.pallas_call(
        textrnn_kernel,
        out_shape=(
            jax.ShapeDtypeStruct((Bp, Cp), jnp.float32),
            jax.ShapeDtypeStruct((Bp, H), jnp.float32),
        ),
        # No grid: single invocation.  Token ids go straight to SMEM; the small fused
        # table and weights are VMEM-resident.  VMEM use is independent of T.
        in_specs=[
            pl.BlockSpec(memory_space=pltpu.MemorySpace.SMEM),   # token ids
            pl.BlockSpec(memory_space=pltpu.MemorySpace.VMEM),   # fused emb@W_ih + b
            pl.BlockSpec(memory_space=pltpu.MemorySpace.VMEM),   # W_hh
            pl.BlockSpec(memory_space=pltpu.MemorySpace.VMEM),   # fc weight (padded)
            pl.BlockSpec(memory_space=pltpu.MemorySpace.VMEM),   # fc bias (padded)
        ],
        out_specs=(
            pl.BlockSpec(memory_space=pltpu.MemorySpace.VMEM),
            pl.BlockSpec(memory_space=pltpu.MemorySpace.VMEM),
        ),
        cost_estimate=cost,
    )(x_tokens.astype(jnp.int32), fused3, w_hh, fc_w_p, fc_b_p)

    return out_p[:B, :C], hid_p[:B]


def _reference(x_tokens, emb_table, w_ih, w_hh, b_gates, fc_w, fc_b):
    """Pure-JAX reference of the same forward pass (for correctness check)."""
    T, B = x_tokens.shape
    H = w_hh.shape[0]
    emb = emb_table[x_tokens.T]                  # (B, T, E)

    def step(carry, x_t):
        h, c = carry
        gates = x_t @ w_ih + h @ w_hh + b_gates[0]
        i = jax.nn.sigmoid(gates[:, 0 * H:1 * H])
        f = jax.nn.sigmoid(gates[:, 1 * H:2 * H])
        g = jnp.tanh(gates[:, 2 * H:3 * H])
        o = jax.nn.sigmoid(gates[:, 3 * H:4 * H])
        c = f * c + i * g
        h = o * jnp.tanh(c)
        return (h, c), None

    h0 = jnp.zeros((B, H), jnp.float32)
    (h, _), _ = jax.lax.scan(step, (h0, h0), jnp.transpose(emb, (1, 0, 2)))
    out = h @ fc_w + fc_b[0]
    return out, h


if __name__ == "__main__":
    # config: rnn_n_vocab=50, rnn_embed=16, rnn_hidden_size=32, len(class_idx)=4
    VOCAB, E, H, C = 50, 16, 32, 4
    T, B = 8, 2   # sequence length, batch

    key = jax.random.PRNGKey(0)
    k_emb, k_wih, k_whh, k_b, k_fcw, k_fcb, k_x = jax.random.split(key, 7)

    emb_table = jax.random.normal(k_emb, (VOCAB, E), jnp.float32) * 0.1
    emb_table = emb_table.at[VOCAB - 1].set(0.0)   # padding_idx row is zero

    # LSTM params (stored pre-transposed: (in, 4H) so kernel does x @ W; gate order i|f|g|o)
    w_ih = jax.random.normal(k_wih, (E, 4 * H), jnp.float32) * 0.1
    w_hh = jax.random.normal(k_whh, (H, 4 * H), jnp.float32) * 0.1
    b_gates = jax.random.normal(k_b, (1, 4 * H), jnp.float32) * 0.1  # b_ih + b_hh combined

    fc_w = jax.random.normal(k_fcw, (H, C), jnp.float32) * 0.1
    fc_b = jax.random.normal(k_fcb, (1, C), jnp.float32) * 0.1

    # module input: (seq_len, batch) integer token ids (permuted inside forward)
    x_tokens = jax.random.randint(k_x, (T, B), 0, VOCAB, jnp.int32)

    out, hidden = text_rnn_forward(x_tokens, emb_table, w_ih, w_hh,
                                   b_gates, fc_w, fc_b)
    jax.block_until_ready((out, hidden))

    ref_out, ref_hidden = _reference(x_tokens, emb_table, w_ih, w_hh,
                                     b_gates, fc_w, fc_b)
    assert out.shape == (B, C) and hidden.shape == (B, H)
    assert jnp.allclose(out, ref_out, atol=1e-5, rtol=1e-5)
    assert jnp.allclose(hidden, ref_hidden, atol=1e-5, rtol=1e-5)

    print("KERNEL_OK")
</pallas_src>

<mosaic_0001>
module attributes {stable_mosaic.version = 11 : i64} {
  func.func @textrnn_kernel(%arg0: memref<8x2xi32, #tpu.memory_space<smem>>, %arg1: memref<50x1x128xf32, #tpu.memory_space<vmem>>, %arg2: memref<32x128xf32, #tpu.memory_space<vmem>>, %arg3: memref<32x128xf32, #tpu.memory_space<vmem>>, %arg4: memref<1x128xf32, #tpu.memory_space<vmem>>, %arg5: memref<8x128xf32, #tpu.memory_space<vmem>>, %arg6: memref<8x32xf32, #tpu.memory_space<vmem>>) attributes {dimension_semantics = [], scalar_prefetch = 0 : i64, scratch_operands = 0 : i64, tpu.core_type = #tpu.core_type<tc>} {
    %c0 = arith.constant 0 : index
    %c0_0 = arith.constant 0 : index
    %0 = vector.load %arg2[%c0, %c0_0] : memref<32x128xf32, #tpu.memory_space<vmem>>, vector<32x128xf32>
    %1 = tpu.iota {dimensions = array<i32: 0>} : vector<8x128xi32>
    %c0_i32 = arith.constant 0 : i32
    %2 = vector.broadcast %c0_i32 : i32 to vector<8x128xi32>
    %3 = arith.cmpi eq, %1, %2 : vector<8x128xi32>
    %c1_i32 = arith.constant 1 : i32
    %4 = vector.broadcast %c1_i32 : i32 to vector<8x128xi32>
    %5 = arith.cmpi eq, %1, %4 : vector<8x128xi32>
    %cst = arith.constant 0.000000e+00 : f32
    %6 = vector.broadcast %cst : f32 to vector<8x128xf32>
    %cst_1 = arith.constant 0.000000e+00 : f32
    %7 = vector.broadcast %cst_1 : f32 to vector<8x32xf32>
    %cst_2 = arith.constant 0.000000e+00 : f32
    %8 = vector.broadcast %cst_2 : f32 to vector<8x32xf32>
    %c0_i32_3 = arith.constant 0 : i32
    %9 = arith.index_cast %c0_i32_3 : i32 to index
    %c0_4 = arith.constant 0 : index
    %10 = memref.load %arg0[%9, %c0_4] : memref<8x2xi32, #tpu.memory_space<smem>>
    %11 = arith.index_cast %10 : i32 to index
    %c0_5 = arith.constant 0 : index
    %c0_6 = arith.constant 0 : index
    %12 = vector.load %arg1[%11, %c0_5, %c0_6] : memref<50x1x128xf32, #tpu.memory_space<vmem>>, vector<1x1x128xf32>
    %13 = vector.shape_cast %12 : vector<1x1x128xf32> to vector<1x128xf32>
    %14 = vector.shape_cast %13 : vector<1x128xf32> to vector<1x128xf32>
    %15 = vector.broadcast %14 : vector<1x128xf32> to vector<8x128xf32>
    %16 = arith.select %3, %15, %6 : vector<8x128xi1>, vector<8x128xf32>
    %17 = arith.index_cast %c0_i32_3 : i32 to index
    %c1 = arith.constant 1 : index
    %18 = memref.load %arg0[%17, %c1] : memref<8x2xi32, #tpu.memory_space<smem>>
    %19 = arith.index_cast %18 : i32 to index
    %c0_7 = arith.constant 0 : index
    %c0_8 = arith.constant 0 : index
    %20 = vector.load %arg1[%19, %c0_7, %c0_8] : memref<50x1x128xf32, #tpu.memory_space<vmem>>, vector<1x1x128xf32>
    %21 = vector.shape_cast %20 : vector<1x1x128xf32> to vector<1x128xf32>
    %22 = vector.shape_cast %21 : vector<1x128xf32> to vector<1x128xf32>
    %23 = vector.broadcast %22 : vector<1x128xf32> to vector<8x128xf32>
    %24 = arith.select %5, %23, %16 : vector<8x128xi1>, vector<8x128xf32>
    %cst_9 = arith.constant dense<0.000000e+00> : vector<8x128xf32>
    %25 = tpu.matmul %7, %0, %cst_9 {dimension_numbers = #tpu.dot_dimension_numbers<[1], [0], [0], [1], [0, 0, 1, 1], [], []>} : vector<8x32xf32>, vector<32x128xf32>, vector<8x128xf32> -> vector<8x128xf32>
    %26 = arith.addf %24, %25 : vector<8x128xf32>
    %27 = arith.negf %26 : vector<8x128xf32>
    %28 = math.exp %27 : vector<8x128xf32>
    %cst_10 = arith.constant 1.000000e+00 : f32
    %29 = vector.broadcast %cst_10 : f32 to vector<8x128xf32>
    %30 = arith.addf %29, %28 : vector<8x128xf32>
    %31 = arith.divf %29, %30 : vector<8x128xf32>
    %32 = math.tanh %26 : vector<8x128xf32>
    %33 = vector.extract_strided_slice %31 {offsets = [0, 0], sizes = [8, 32], strides = [1, 1]} : vector<8x128xf32> to vector<8x32xf32>
    %34 = vector.extract_strided_slice %31 {offsets = [0, 32], sizes = [8, 32], strides = [1, 1]} : vector<8x128xf32> to vector<8x32xf32>
    %35 = vector.extract_strided_slice %32 {offsets = [0, 64], sizes = [8, 32], strides = [1, 1]} : vector<8x128xf32> to vector<8x32xf32>
    %36 = vector.extract_strided_slice %31 {offsets = [0, 96], sizes = [8, 32], strides = [1, 1]} : vector<8x128xf32> to vector<8x32xf32>
    %37 = arith.mulf %34, %8 : vector<8x32xf32>
    %38 = arith.mulf %33, %35 : vector<8x32xf32>
    %39 = arith.addf %37, %38 : vector<8x32xf32>
    %40 = math.tanh %39 : vector<8x32xf32>
    %41 = arith.mulf %36, %40 : vector<8x32xf32>
    %c1_i32_11 = arith.constant 1 : i32
    %42 = arith.index_cast %c1_i32_11 : i32 to index
    %c0_12 = arith.constant 0 : index
    %43 = memref.load %arg0[%42, %c0_12] : memref<8x2xi32, #tpu.memory_space<smem>>
    %44 = arith.index_cast %43 : i32 to index
    %c0_13 = arith.constant 0 : index
    %c0_14 = arith.constant 0 : index
    %45 = vector.load %arg1[%44, %c0_13, %c0_14] : memref<50x1x128xf32, #tpu.memory_space<vmem>>, vector<1x1x128xf32>
    %46 = vector.shape_cast %45 : vector<1x1x128xf32> to vector<1x128xf32>
    %47 = vector.shape_cast %46 : vector<1x128xf32> to vector<1x128xf32>
    %48 = vector.broadcast %47 : vector<1x128xf32> to vector<8x128xf32>
    %49 = arith.select %3, %48, %6 : vector<8x128xi1>, vector<8x128xf32>
    %50 = arith.index_cast %c1_i32_11 : i32 to index
    %c1_15 = arith.constant 1 : index
    %51 = memref.load %arg0[%50, %c1_15] : memref<8x2xi32, #tpu.memory_space<smem>>
    %52 = arith.index_cast %51 : i32 to index
    %c0_16 = arith.constant 0 : index
    %c0_17 = arith.constant 0 : index
    %53 = vector.load %arg1[%52, %c0_16, %c0_17] : memref<50x1x128xf32, #tpu.memory_space<vmem>>, vector<1x1x128xf32>
    %54 = vector.shape_cast %53 : vector<1x1x128xf32> to vector<1x128xf32>
    %55 = vector.shape_cast %54 : vector<1x128xf32> to vector<1x128xf32>
    %56 = vector.broadcast %55 : vector<1x128xf32> to vector<8x128xf32>
    %57 = arith.select %5, %56, %49 : vector<8x128xi1>, vector<8x128xf32>
    %cst_18 = arith.constant dense<0.000000e+00> : vector<8x128xf32>
    %58 = tpu.matmul %41, %0, %cst_18 {dimension_numbers = #tpu.dot_dimension_numbers<[1], [0], [0], [1], [0, 0, 1, 1], [], []>} : vector<8x32xf32>, vector<32x128xf32>, vector<8x128xf32> -> vector<8x128xf32>
    %59 = arith.addf %57, %58 : vector<8x128xf32>
    %60 = arith.negf %59 : vector<8x128xf32>
    %61 = math.exp %60 : vector<8x128xf32>
    %cst_19 = arith.constant 1.000000e+00 : f32
    %62 = vector.broadcast %cst_19 : f32 to vector<8x128xf32>
    %63 = arith.addf %62, %61 : vector<8x128xf32>
    %64 = arith.divf %62, %63 : vector<8x128xf32>
    %65 = math.tanh %59 : vector<8x128xf32>
    %66 = vector.extract_strided_slice %64 {offsets = [0, 0], sizes = [8, 32], strides = [1, 1]} : vector<8x128xf32> to vector<8x32xf32>
    %67 = vector.extract_strided_slice %64 {offsets = [0, 32], sizes = [8, 32], strides = [1, 1]} : vector<8x128xf32> to vector<8x32xf32>
    %68 = vector.extract_strided_slice %65 {offsets = [0, 64], sizes = [8, 32], strides = [1, 1]} : vector<8x128xf32> to vector<8x32xf32>
    %69 = vector.extract_strided_slice %64 {offsets = [0, 96], sizes = [8, 32], strides = [1, 1]} : vector<8x128xf32> to vector<8x32xf32>
    %70 = arith.mulf %67, %39 : vector<8x32xf32>
    %71 = arith.mulf %66, %68 : vector<8x32xf32>
    %72 = arith.addf %70, %71 : vector<8x32xf32>
    %73 = math.tanh %72 : vector<8x32xf32>
    %74 = arith.mulf %69, %73 : vector<8x32xf32>
    %c2_i32 = arith.constant 2 : i32
    %75 = arith.index_cast %c2_i32 : i32 to index
    %c0_20 = arith.constant 0 : index
    %76 = memref.load %arg0[%75, %c0_20] : memref<8x2xi32, #tpu.memory_space<smem>>
    %77 = arith.index_cast %76 : i32 to index
    %c0_21 = arith.constant 0 : index
    %c0_22 = arith.constant 0 : index
    %78 = vector.load %arg1[%77, %c0_21, %c0_22] : memref<50x1x128xf32, #tpu.memory_space<vmem>>, vector<1x1x128xf32>
    %79 = vector.shape_cast %78 : vector<1x1x128xf32> to vector<1x128xf32>
    %80 = vector.shape_cast %79 : vector<1x128xf32> to vector<1x128xf32>
    %81 = vector.broadcast %80 : vector<1x128xf32> to vector<8x128xf32>
    %82 = arith.select %3, %81, %6 : vector<8x128xi1>, vector<8x128xf32>
    %83 = arith.index_cast %c2_i32 : i32 to index
    %c1_23 = arith.constant 1 : index
    %84 = memref.load %arg0[%83, %c1_23] : memref<8x2xi32, #tpu.memory_space<smem>>
    %85 = arith.index_cast %84 : i32 to index
    %c0_24 = arith.constant 0 : index
    %c0_25 = arith.constant 0 : index
    %86 = vector.load %arg1[%85, %c0_24, %c0_25] : memref<50x1x128xf32, #tpu.memory_space<vmem>>, vector<1x1x128xf32>
    %87 = vector.shape_cast %86 : vector<1x1x128xf32> to vector<1x128xf32>
    %88 = vector.shape_cast %87 : vector<1x128xf32> to vector<1x128xf32>
    %89 = vector.broadcast %88 : vector<1x128xf32> to vector<8x128xf32>
    %90 = arith.select %5, %89, %82 : vector<8x128xi1>, vector<8x128xf32>
    %cst_26 = arith.constant dense<0.000000e+00> : vector<8x128xf32>
    %91 = tpu.matmul %74, %0, %cst_26 {dimension_numbers = #tpu.dot_dimension_numbers<[1], [0], [0], [1], [0, 0, 1, 1], [], []>} : vector<8x32xf32>, vector<32x128xf32>, vector<8x128xf32> -> vector<8x128xf32>
    %92 = arith.addf %90, %91 : vector<8x128xf32>
    %93 = arith.negf %92 : vector<8x128xf32>
    %94 = math.exp %93 : vector<8x128xf32>
    %cst_27 = arith.constant 1.000000e+00 : f32
    %95 = vector.broadcast %cst_27 : f32 to vector<8x128xf32>
    %96 = arith.addf %95, %94 : vector<8x128xf32>
    %97 = arith.divf %95, %96 : vector<8x128xf32>
    %98 = math.tanh %92 : vector<8x128xf32>
    %99 = vector.extract_strided_slice %97 {offsets = [0, 0], sizes = [8, 32], strides = [1, 1]} : vector<8x128xf32> to vector<8x32xf32>
    %100 = vector.extract_strided_slice %97 {offsets = [0, 32], sizes = [8, 32], strides = [1, 1]} : vector<8x128xf32> to vector<8x32xf32>
    %101 = vector.extract_strided_slice %98 {offsets = [0, 64], sizes = [8, 32], strides = [1, 1]} : vector<8x128xf32> to vector<8x32xf32>
    %102 = vector.extract_strided_slice %97 {offsets = [0, 96], sizes = [8, 32], strides = [1, 1]} : vector<8x128xf32> to vector<8x32xf32>
    %103 = arith.mulf %100, %72 : vector<8x32xf32>
    %104 = arith.mulf %99, %101 : vector<8x32xf32>
    %105 = arith.addf %103, %104 : vector<8x32xf32>
    %106 = math.tanh %105 : vector<8x32xf32>
    %107 = arith.mulf %102, %106 : vector<8x32xf32>
    %c3_i32 = arith.constant 3 : i32
    %108 = arith.index_cast %c3_i32 : i32 to index
    %c0_28 = arith.constant 0 : index
    %109 = memref.load %arg0[%108, %c0_28] : memref<8x2xi32, #tpu.memory_space<smem>>
    %110 = arith.index_cast %109 : i32 to index
    %c0_29 = arith.constant 0 : index
    %c0_30 = arith.constant 0 : index
    %111 = vector.load %arg1[%110, %c0_29, %c0_30] : memref<50x1x128xf32, #tpu.memory_space<vmem>>, vector<1x1x128xf32>
    %112 = vector.shape_cast %111 : vector<1x1x128xf32> to vector<1x128xf32>
    %113 = vector.shape_cast %112 : vector<1x128xf32> to vector<1x128xf32>
    %114 = vector.broadcast %113 : vector<1x128xf32> to vector<8x128xf32>
    %115 = arith.select %3, %114, %6 : vector<8x128xi1>, vector<8x128xf32>
    %116 = arith.index_cast %c3_i32 : i32 to index
    %c1_31 = arith.constant 1 : index
    %117 = memref.load %arg0[%116, %c1_31] : memref<8x2xi32, #tpu.memory_space<smem>>
    %118 = arith.index_cast %117 : i32 to index
    %c0_32 = arith.constant 0 : index
    %c0_33 = arith.constant 0 : index
    %119 = vector.load %arg1[%118, %c0_32, %c0_33] : memref<50x1x128xf32, #tpu.memory_space<vmem>>, vector<1x1x128xf32>
    %120 = vector.shape_cast %119 : vector<1x1x128xf32> to vector<1x128xf32>
    %121 = vector.shape_cast %120 : vector<1x128xf32> to vector<1x128xf32>
    %122 = vector.broadcast %121 : vector<1x128xf32> to vector<8x128xf32>
    %123 = arith.select %5, %122, %115 : vector<8x128xi1>, vector<8x128xf32>
    %cst_34 = arith.constant dense<0.000000e+00> : vector<8x128xf32>
    %124 = tpu.matmul %107, %0, %cst_34 {dimension_numbers = #tpu.dot_dimension_numbers<[1], [0], [0], [1], [0, 0, 1, 1], [], []>} : vector<8x32xf32>, vector<32x128xf32>, vector<8x128xf32> -> vector<8x128xf32>
    %125 = arith.addf %123, %124 : vector<8x128xf32>
    %126 = arith.negf %125 : vector<8x128xf32>
    %127 = math.exp %126 : vector<8x128xf32>
    %cst_35 = arith.constant 1.000000e+00 : f32
    %128 = vector.broadcast %cst_35 : f32 to vector<8x128xf32>
    %129 = arith.addf %128, %127 : vector<8x128xf32>
    %130 = arith.divf %128, %129 : vector<8x128xf32>
    %131 = math.tanh %125 : vector<8x128xf32>
    %132 = vector.extract_strided_slice %130 {offsets = [0, 0], sizes = [8, 32], strides = [1, 1]} : vector<8x128xf32> to vector<8x32xf32>
    %133 = vector.extract_strided_slice %130 {offsets = [0, 32], sizes = [8, 32], strides = [1, 1]} : vector<8x128xf32> to vector<8x32xf32>
    %134 = vector.extract_strided_slice %131 {offsets = [0, 64], sizes = [8, 32], strides = [1, 1]} : vector<8x128xf32> to vector<8x32xf32>
    %135 = vector.extract_strided_slice %130 {offsets = [0, 96], sizes = [8, 32], strides = [1, 1]} : vector<8x128xf32> to vector<8x32xf32>
    %136 = arith.mulf %133, %105 : vector<8x32xf32>
    %137 = arith.mulf %132, %134 : vector<8x32xf32>
    %138 = arith.addf %136, %137 : vector<8x32xf32>
    %139 = math.tanh %138 : vector<8x32xf32>
    %140 = arith.mulf %135, %139 : vector<8x32xf32>
    %c4_i32 = arith.constant 4 : i32
    %141 = arith.index_cast %c4_i32 : i32 to index
    %c0_36 = arith.constant 0 : index
    %142 = memref.load %arg0[%141, %c0_36] : memref<8x2xi32, #tpu.memory_space<smem>>
    %143 = arith.index_cast %142 : i32 to index
    %c0_37 = arith.constant 0 : index
    %c0_38 = arith.constant 0 : index
    %144 = vector.load %arg1[%143, %c0_37, %c0_38] : memref<50x1x128xf32, #tpu.memory_space<vmem>>, vector<1x1x128xf32>
    %145 = vector.shape_cast %144 : vector<1x1x128xf32> to vector<1x128xf32>
    %146 = vector.shape_cast %145 : vector<1x128xf32> to vector<1x128xf32>
    %147 = vector.broadcast %146 : vector<1x128xf32> to vector<8x128xf32>
    %148 = arith.select %3, %147, %6 : vector<8x128xi1>, vector<8x128xf32>
    %149 = arith.index_cast %c4_i32 : i32 to index
    %c1_39 = arith.constant 1 : index
    %150 = memref.load %arg0[%149, %c1_39] : memref<8x2xi32, #tpu.memory_space<smem>>
    %151 = arith.index_cast %150 : i32 to index
    %c0_40 = arith.constant 0 : index
    %c0_41 = arith.constant 0 : index
    %152 = vector.load %arg1[%151, %c0_40, %c0_41] : memref<50x1x128xf32, #tpu.memory_space<vmem>>, vector<1x1x128xf32>
    %153 = vector.shape_cast %152 : vector<1x1x128xf32> to vector<1x128xf32>
    %154 = vector.shape_cast %153 : vector<1x128xf32> to vector<1x128xf32>
    %155 = vector.broadcast %154 : vector<1x128xf32> to vector<8x128xf32>
    %156 = arith.select %5, %155, %148 : vector<8x128xi1>, vector<8x128xf32>
    %cst_42 = arith.constant dense<0.000000e+00> : vector<8x128xf32>
    %157 = tpu.matmul %140, %0, %cst_42 {dimension_numbers = #tpu.dot_dimension_numbers<[1], [0], [0], [1], [0, 0, 1, 1], [], []>} : vector<8x32xf32>, vector<32x128xf32>, vector<8x128xf32> -> vector<8x128xf32>
    %158 = arith.addf %156, %157 : vector<8x128xf32>
    %159 = arith.negf %158 : vector<8x128xf32>
    %160 = math.exp %159 : vector<8x128xf32>
    %cst_43 = arith.constant 1.000000e+00 : f32
    %161 = vector.broadcast %cst_43 : f32 to vector<8x128xf32>
    %162 = arith.addf %161, %160 : vector<8x128xf32>
    %163 = arith.divf %161, %162 : vector<8x128xf32>
    %164 = math.tanh %158 : vector<8x128xf32>
    %165 = vector.extract_strided_slice %163 {offsets = [0, 0], sizes = [8, 32], strides = [1, 1]} : vector<8x128xf32> to vector<8x32xf32>
    %166 = vector.extract_strided_slice %163 {offsets = [0, 32], sizes = [8, 32], strides = [1, 1]} : vector<8x128xf32> to vector<8x32xf32>
    %167 = vector.extract_strided_slice %164 {offsets = [0, 64], sizes = [8, 32], strides = [1, 1]} : vector<8x128xf32> to vector<8x32xf32>
    %168 = vector.extract_strided_slice %163 {offsets = [0, 96], sizes = [8, 32], strides = [1, 1]} : vector<8x128xf32> to vector<8x32xf32>
    %169 = arith.mulf %166, %138 : vector<8x32xf32>
    %170 = arith.mulf %165, %167 : vector<8x32xf32>
    %171 = arith.addf %169, %170 : vector<8x32xf32>
    %172 = math.tanh %171 : vector<8x32xf32>
    %173 = arith.mulf %168, %172 : vector<8x32xf32>
    %c5_i32 = arith.constant 5 : i32
    %174 = arith.index_cast %c5_i32 : i32 to index
    %c0_44 = arith.constant 0 : index
    %175 = memref.load %arg0[%174, %c0_44] : memref<8x2xi32, #tpu.memory_space<smem>>
    %176 = arith.index_cast %175 : i32 to index
    %c0_45 = arith.constant 0 : index
    %c0_46 = arith.constant 0 : index
    %177 = vector.load %arg1[%176, %c0_45, %c0_46] : memref<50x1x128xf32, #tpu.memory_space<vmem>>, vector<1x1x128xf32>
    %178 = vector.shape_cast %177 : vector<1x1x128xf32> to vector<1x128xf32>
    %179 = vector.shape_cast %178 : vector<1x128xf32> to vector<1x128xf32>
    %180 = vector.broadcast %179 : vector<1x128xf32> to vector<8x128xf32>
    %181 = arith.select %3, %180, %6 : vector<8x128xi1>, vector<8x128xf32>
    %182 = arith.index_cast %c5_i32 : i32 to index
    %c1_47 = arith.constant 1 : index
    %183 = memref.load %arg0[%182, %c1_47] : memref<8x2xi32, #tpu.memory_space<smem>>
    %184 = arith.index_cast %183 : i32 to index
    %c0_48 = arith.constant 0 : index
    %c0_49 = arith.constant 0 : index
    %185 = vector.load %arg1[%184, %c0_48, %c0_49] : memref<50x1x128xf32, #tpu.memory_space<vmem>>, vector<1x1x128xf32>
    %186 = vector.shape_cast %185 : vector<1x1x128xf32> to vector<1x128xf32>
    %187 = vector.shape_cast %186 : vector<1x128xf32> to vector<1x128xf32>
    %188 = vector.broadcast %187 : vector<1x128xf32> to vector<8x128xf32>
    %189 = arith.select %5, %188, %181 : vector<8x128xi1>, vector<8x128xf32>
    %cst_50 = arith.constant dense<0.000000e+00> : vector<8x128xf32>
    %190 = tpu.matmul %173, %0, %cst_50 {dimension_numbers = #tpu.dot_dimension_numbers<[1], [0], [0], [1], [0, 0, 1, 1], [], []>} : vector<8x32xf32>, vector<32x128xf32>, vector<8x128xf32> -> vector<8x128xf32>
    %191 = arith.addf %189, %190 : vector<8x128xf32>
    %192 = arith.negf %191 : vector<8x128xf32>
    %193 = math.exp %192 : vector<8x128xf32>
    %cst_51 = arith.constant 1.000000e+00 : f32
    %194 = vector.broadcast %cst_51 : f32 to vector<8x128xf32>
    %195 = arith.addf %194, %193 : vector<8x128xf32>
    %196 = arith.divf %194, %195 : vector<8x128xf32>
    %197 = math.tanh %191 : vector<8x128xf32>
    %198 = vector.extract_strided_slice %196 {offsets = [0, 0], sizes = [8, 32], strides = [1, 1]} : vector<8x128xf32> to vector<8x32xf32>
    %199 = vector.extract_strided_slice %196 {offsets = [0, 32], sizes = [8, 32], strides = [1, 1]} : vector<8x128xf32> to vector<8x32xf32>
    %200 = vector.extract_strided_slice %197 {offsets = [0, 64], sizes = [8, 32], strides = [1, 1]} : vector<8x128xf32> to vector<8x32xf32>
    %201 = vector.extract_strided_slice %196 {offsets = [0, 96], sizes = [8, 32], strides = [1, 1]} : vector<8x128xf32> to vector<8x32xf32>
    %202 = arith.mulf %199, %171 : vector<8x32xf32>
    %203 = arith.mulf %198, %200 : vector<8x32xf32>
    %204 = arith.addf %202, %203 : vector<8x32xf32>
    %205 = math.tanh %204 : vector<8x32xf32>
    %206 = arith.mulf %201, %205 : vector<8x32xf32>
    %c6_i32 = arith.constant 6 : i32
    %207 = arith.index_cast %c6_i32 : i32 to index
    %c0_52 = arith.constant 0 : index
    %208 = memref.load %arg0[%207, %c0_52] : memref<8x2xi32, #tpu.memory_space<smem>>
    %209 = arith.index_cast %208 : i32 to index
    %c0_53 = arith.constant 0 : index
    %c0_54 = arith.constant 0 : index
    %210 = vector.load %arg1[%209, %c0_53, %c0_54] : memref<50x1x128xf32, #tpu.memory_space<vmem>>, vector<1x1x128xf32>
    %211 = vector.shape_cast %210 : vector<1x1x128xf32> to vector<1x128xf32>
    %212 = vector.shape_cast %211 : vector<1x128xf32> to vector<1x128xf32>
    %213 = vector.broadcast %212 : vector<1x128xf32> to vector<8x128xf32>
    %214 = arith.select %3, %213, %6 : vector<8x128xi1>, vector<8x128xf32>
    %215 = arith.index_cast %c6_i32 : i32 to index
    %c1_55 = arith.constant 1 : index
    %216 = memref.load %arg0[%215, %c1_55] : memref<8x2xi32, #tpu.memory_space<smem>>
    %217 = arith.index_cast %216 : i32 to index
    %c0_56 = arith.constant 0 : index
    %c0_57 = arith.constant 0 : index
    %218 = vector.load %arg1[%217, %c0_56, %c0_57] : memref<50x1x128xf32, #tpu.memory_space<vmem>>, vector<1x1x128xf32>
    %219 = vector.shape_cast %218 : vector<1x1x128xf32> to vector<1x128xf32>
    %220 = vector.shape_cast %219 : vector<1x128xf32> to vector<1x128xf32>
    %221 = vector.broadcast %220 : vector<1x128xf32> to vector<8x128xf32>
    %222 = arith.select %5, %221, %214 : vector<8x128xi1>, vector<8x128xf32>
    %cst_58 = arith.constant dense<0.000000e+00> : vector<8x128xf32>
    %223 = tpu.matmul %206, %0, %cst_58 {dimension_numbers = #tpu.dot_dimension_numbers<[1], [0], [0], [1], [0, 0, 1, 1], [], []>} : vector<8x32xf32>, vector<32x128xf32>, vector<8x128xf32> -> vector<8x128xf32>
    %224 = arith.addf %222, %223 : vector<8x128xf32>
    %225 = arith.negf %224 : vector<8x128xf32>
    %226 = math.exp %225 : vector<8x128xf32>
    %cst_59 = arith.constant 1.000000e+00 : f32
    %227 = vector.broadcast %cst_59 : f32 to vector<8x128xf32>
    %228 = arith.addf %227, %226 : vector<8x128xf32>
    %229 = arith.divf %227, %228 : vector<8x128xf32>
    %230 = math.tanh %224 : vector<8x128xf32>
    %231 = vector.extract_strided_slice %229 {offsets = [0, 0], sizes = [8, 32], strides = [1, 1]} : vector<8x128xf32> to vector<8x32xf32>
    %232 = vector.extract_strided_slice %229 {offsets = [0, 32], sizes = [8, 32], strides = [1, 1]} : vector<8x128xf32> to vector<8x32xf32>
    %233 = vector.extract_strided_slice %230 {offsets = [0, 64], sizes = [8, 32], strides = [1, 1]} : vector<8x128xf32> to vector<8x32xf32>
    %234 = vector.extract_strided_slice %229 {offsets = [0, 96], sizes = [8, 32], strides = [1, 1]} : vector<8x128xf32> to vector<8x32xf32>
    %235 = arith.mulf %232, %204 : vector<8x32xf32>
    %236 = arith.mulf %231, %233 : vector<8x32xf32>
    %237 = arith.addf %235, %236 : vector<8x32xf32>
    %238 = math.tanh %237 : vector<8x32xf32>
    %239 = arith.mulf %234, %238 : vector<8x32xf32>
    %c7_i32 = arith.constant 7 : i32
    %240 = arith.index_cast %c7_i32 : i32 to index
    %c0_60 = arith.constant 0 : index
    %241 = memref.load %arg0[%240, %c0_60] : memref<8x2xi32, #tpu.memory_space<smem>>
    %242 = arith.index_cast %241 : i32 to index
    %c0_61 = arith.constant 0 : index
    %c0_62 = arith.constant 0 : index
    %243 = vector.load %arg1[%242, %c0_61, %c0_62] : memref<50x1x128xf32, #tpu.memory_space<vmem>>, vector<1x1x128xf32>
    %244 = vector.shape_cast %243 : vector<1x1x128xf32> to vector<1x128xf32>
    %245 = vector.shape_cast %244 : vector<1x128xf32> to vector<1x128xf32>
    %246 = vector.broadcast %245 : vector<1x128xf32> to vector<8x128xf32>
    %247 = arith.select %3, %246, %6 : vector<8x128xi1>, vector<8x128xf32>
    %248 = arith.index_cast %c7_i32 : i32 to index
    %c1_63 = arith.constant 1 : index
    %249 = memref.load %arg0[%248, %c1_63] : memref<8x2xi32, #tpu.memory_space<smem>>
    %250 = arith.index_cast %249 : i32 to index
    %c0_64 = arith.constant 0 : index
    %c0_65 = arith.constant 0 : index
    %251 = vector.load %arg1[%250, %c0_64, %c0_65] : memref<50x1x128xf32, #tpu.memory_space<vmem>>, vector<1x1x128xf32>
    %252 = vector.shape_cast %251 : vector<1x1x128xf32> to vector<1x128xf32>
    %253 = vector.shape_cast %252 : vector<1x128xf32> to vector<1x128xf32>
    %254 = vector.broadcast %253 : vector<1x128xf32> to vector<8x128xf32>
    %255 = arith.select %5, %254, %247 : vector<8x128xi1>, vector<8x128xf32>
    %cst_66 = arith.constant dense<0.000000e+00> : vector<8x128xf32>
    %256 = tpu.matmul %239, %0, %cst_66 {dimension_numbers = #tpu.dot_dimension_numbers<[1], [0], [0], [1], [0, 0, 1, 1], [], []>} : vector<8x32xf32>, vector<32x128xf32>, vector<8x128xf32> -> vector<8x128xf32>
    %257 = arith.addf %255, %256 : vector<8x128xf32>
    %258 = arith.negf %257 : vector<8x128xf32>
    %259 = math.exp %258 : vector<8x128xf32>
    %cst_67 = arith.constant 1.000000e+00 : f32
    %260 = vector.broadcast %cst_67 : f32 to vector<8x128xf32>
    %261 = arith.addf %260, %259 : vector<8x128xf32>
    %262 = arith.divf %260, %261 : vector<8x128xf32>
    %263 = math.tanh %257 : vector<8x128xf32>
    %264 = vector.extract_strided_slice %262 {offsets = [0, 0], sizes = [8, 32], strides = [1, 1]} : vector<8x128xf32> to vector<8x32xf32>
    %265 = vector.extract_strided_slice %262 {offsets = [0, 32], sizes = [8, 32], strides = [1, 1]} : vector<8x128xf32> to vector<8x32xf32>
    %266 = vector.extract_strided_slice %263 {offsets = [0, 64], sizes = [8, 32], strides = [1, 1]} : vector<8x128xf32> to vector<8x32xf32>
    %267 = vector.extract_strided_slice %262 {offsets = [0, 96], sizes = [8, 32], strides = [1, 1]} : vector<8x128xf32> to vector<8x32xf32>
    %268 = arith.mulf %265, %237 : vector<8x32xf32>
    %269 = arith.mulf %264, %266 : vector<8x32xf32>
    %270 = arith.addf %268, %269 : vector<8x32xf32>
    %271 = math.tanh %270 : vector<8x32xf32>
    %272 = arith.mulf %267, %271 : vector<8x32xf32>
    %c8_i32 = arith.constant 8 : i32
    %c0_68 = arith.constant 0 : index
    %c0_69 = arith.constant 0 : index
    %273 = vector.load %arg6[%c0_68, %c0_69] : memref<8x32xf32, #tpu.memory_space<vmem>>, vector<8x32xf32>
    tpu.vector_store %arg6[%c0_68, %c0_69], %272 {strides = array<i32>} : memref<8x32xf32, #tpu.memory_space<vmem>>, vector<8x32xf32>,
    %c0_70 = arith.constant 0 : index
    %c0_71 = arith.constant 0 : index
    %274 = vector.load %arg3[%c0_70, %c0_71] : memref<32x128xf32, #tpu.memory_space<vmem>>, vector<32x128xf32>
    %cst_72 = arith.constant dense<0.000000e+00> : vector<8x128xf32>
    %275 = tpu.matmul %272, %274, %cst_72 {dimension_numbers = #tpu.dot_dimension_numbers<[1], [0], [0], [1], [0, 0, 1, 1], [], []>} : vector<8x32xf32>, vector<32x128xf32>, vector<8x128xf32> -> vector<8x128xf32>
    %c0_73 = arith.constant 0 : index
    %c0_74 = arith.constant 0 : index
    %276 = vector.load %arg4[%c0_73, %c0_74] : memref<1x128xf32, #tpu.memory_space<vmem>>, vector<1x128xf32>
    %277 = vector.broadcast %276 : vector<1x128xf32> to vector<8x128xf32>
    %278 = arith.addf %275, %277 : vector<8x128xf32>
    %c0_75 = arith.constant 0 : index
    %c0_76 = arith.constant 0 : index
    %279 = vector.load %arg5[%c0_75, %c0_76] : memref<8x128xf32, #tpu.memory_space<vmem>>, vector<8x128xf32>
    tpu.vector_store %arg5[%c0_75, %c0_76], %278 {strides = array<i32>} : memref<8x128xf32, #tpu.memory_space<vmem>>, vector<8x128xf32>,
    return
  }
}

</mosaic_0001>

<llo_original>
// kernel: text_rnn_forward.1
$region0: #{text_rnn_forward.1}
  #allocation0 [shape = 'u32[]', space=smem, size = 0x4, offset = 0x4, fixed_abs, tag = 'smem constant byte address 0x4 - core index']
  #allocation1 [shape = 'u32[144,128]{1,0:T(1,128)}', space=vmem, size = 0x12000, scoped, tag = 'internal scratch']
  %s0 = inlined_call_operand.vmem [shape: s32[8,2], index: 0, kind: input, shape index: {}]
  %s1 = inlined_call_operand.vmem [shape: f32[50,1,128], index: 1, kind: input, shape index: {}]
  %s2 = inlined_call_operand.vmem [shape: f32[32,128], index: 2, kind: input, shape index: {}]
  %s3 = inlined_call_operand.vmem [shape: f32[32,128], index: 3, kind: input, shape index: {}]
  %s4 = inlined_call_operand.vmem [shape: f32[1,128], index: 4, kind: input, shape index: {}]
  %s5 = inlined_call_operand.vmem [shape: f32[8,128], index: 5, kind: output, shape index: {0}]
  %s6 = inlined_call_operand.vmem [shape: f32[8,32], index: 6, kind: output, shape index: {1}]
  %7 = xla_tuple %s5, %s6
  %s8 = sld [smem:[#allocation0]]
  $region42: #{text_rnn_forward.1} parent=0
    _
  %s10 = ssub.s32 1, %s8
  %s11 = scalar_select 0, %s10, %s8
  $region1: #{text_rnn_forward.1} parent=0
    #allocation2 [shape = 'u8[4096]{0}', space=smem, size = 0x1000, scoped, tag = 'input window, operand 0, single buffered']
    #allocation3 [shape = 's32[1]{0}', space=sflag, size = 0x4, scoped, tag = 'scoped memory for text_rnn_forward.1']
    %12 = vsyncpa [#allocation3], 0
    // Predicated region
    $region2: #{text_rnn_forward.1} parent=1 // pred_check
      _
    $region3: #{text_rnn_forward.1} parent=1 // pred_check_branch
      %14 = sbr.rel (0) target = $region5
    $region4: #{text_rnn_forward.1} parent=1 // pred_region
      %s16 = ssub.s32 128, 128
      %17 = vsyncadd [#allocation3], %s16
      %s19 = sshll.u32 %s0, 4
      %s20 = int_to_ptr.vmem [resolvable:$true] %s19
      %22 = dma.vmem_to_smem %s20, 128, [#allocation2], [#allocation3]
    $region5: #{text_rnn_forward.1} parent=1 // pred_fallthru
      _
    // Predicated region
    $region6: #{text_rnn_forward.1} parent=1 // pred_check
      _
    $region7: #{text_rnn_forward.1} parent=1 // pred_check_branch
      %24 = sbr.rel (0) target = $region9
    $region8: #{text_rnn_forward.1} parent=1 // pred_region
      _
    $region9: #{text_rnn_forward.1} parent=1 // pred_fallthru
      _
    // Predicated region
    $region10: #{text_rnn_forward.1} parent=1 // pred_check
      _
    $region11: #{text_rnn_forward.1} parent=1 // pred_check_branch
      %26 = sbr.rel (0) target = $region13
    $region12: #{text_rnn_forward.1} parent=1 // pred_region
      _
    $region13: #{text_rnn_forward.1} parent=1 // pred_fallthru
      _
    // Predicated region
    $region14: #{text_rnn_forward.1} parent=1 // pred_check
      _
    $region15: #{text_rnn_forward.1} parent=1 // pred_check_branch
      %28 = sbr.rel (0) target = $region17
    $region16: #{text_rnn_forward.1} parent=1 // pred_region
      _
    $region17: #{text_rnn_forward.1} parent=1 // pred_fallthru
      _
    // Predicated region
    $region18: #{text_rnn_forward.1} parent=1 // pred_check
      _
    $region19: #{text_rnn_forward.1} parent=1 // pred_check_branch
      %30 = sbr.rel (0) target = $region21
    $region20: #{text_rnn_forward.1} parent=1 // pred_region
      _
    $region21: #{text_rnn_forward.1} parent=1 // pred_fallthru
      _
    // Predicated region
    $region22: #{text_rnn_forward.1} parent=1 // pred_check
      _
    $region23: #{text_rnn_forward.1} parent=1 // pred_check_branch
      %32 = sbr.rel (0) target = $region25
    $region24: #{text_rnn_forward.1} parent=1 // pred_region
      %33 = dma.done [#allocation3], 128
    $region25: #{text_rnn_forward.1} parent=1 // pred_fallthru
      _
    %34 = sfence
    %v35 = vld [vmem:[%s2] sm:$0xff]
    %v36 = vld [vmem:[%s2 + $0x8] sm:$0xff]
    %v37 = vld [vmem:[%s2 + $0x10] sm:$0xff]
    %v38 = vld [vmem:[%s2 + $0x18] sm:$0xff]
    %v39 = vlaneseq
    %v40 = vshrl.u32 %v39, 7
    %vm41 = vcmp.eq.s32.totalorder %v40, 0
    %vm42 = vcmp.eq.s32.totalorder %v40, 1
    %s43 = sld [smem:[#allocation2]]
    %s44 = scalar_lea.vmem %s1, %s43
    %v45 = vld [vmem:[%s44] sm:$0x1]
    %v47 = vlaneseq
    %v48 = vshrl.u32 %v47, 7
    %v49 = vsub.s32 0, %v48
    %v50 = vrot.slane %v45, %v49
    %v52 = vsel %vm41, %v50, 0.0
    %s53 = sld [smem:[#allocation2 + $0x1]]
    %s54 = scalar_lea.vmem %s1, %s53
    %v55 = vld [vmem:[%s54] sm:$0x1]
    %v57 = vlaneseq
    %v58 = vshrl.u32 %v57, 7
    %v59 = vsub.s32 0, %v58
    %v60 = vrot.slane %v55, %v59
    %v62 = vsel %vm42, %v60, %v52
    %vm63 = vcmask 261120
    %v65 = vsel %vm63, 0.0, 0
    %67 = vmatprep.subr.mxu0 0.0
    %68 = vmatpush1.msra.mxu0 0.0
    %69 = vmatprep.subr.mxu0 0.0
    %70 = vmatpush1.msra.mxu0 0.0
    %71 = vmatprep.subr.mxu0 0.0
    %72 = vmatpush1.msra.mxu0 0.0
    %73 = vmatprep.subr.mxu0 0.0
    %74 = vmatpush1.msra.mxu0 0.0
    %75 = vmatprep.subr.mxu0 0.0
    %76 = vmatpush1.msra.mxu0 0.0
    %77 = vmatprep.subr.mxu0 0.0
    %78 = vmatpush1.msra.mxu0 0.0
    %79 = vmatprep.subr.mxu0 0.0
    %80 = vmatpush1.msra.mxu0 0.0
    %81 = vmatprep.subr.mxu0 0.0
    %82 = vmatpush1.msra.mxu0 0.0
    %83 = vmatprep.subr.mxu0 0.0
    %84 = vmatpush1.msra.mxu0 0.0
    %85 = vmatprep.subr.mxu0 0.0
    %86 = vmatpush1.msra.mxu0 0.0
    %87 = vmatprep.subr.mxu0 0.0
    %88 = vmatpush1.msra.mxu0 0.0
    %89 = vmatprep.subr.mxu0 0.0
    %90 = vmatpush1.msra.mxu0 0.0
    %91 = vmatprep.subr.mxu0 0.0
    %92 = vmatpush1.msra.mxu0 %v38
    %93 = vmatprep.subr.mxu0 0.0
    %94 = vmatpush1.msra.mxu0 %v37
    %95 = vmatprep.subr.mxu0 0.0
    %96 = vmatpush1.msra.mxu0 %v36
    %97 = vmatprep.subr.mxu0 0.0
    %98 = vmatpush1.msra.mxu0 %v35
    %99 = vmatprep.subr.mxu0 0.0
    %100 = vmatpush2.msra.mxu0 0.0
    %101 = vmatprep.subr.mxu0 0.0
    %102 = vmatpush2.msra.mxu0 0.0
    %103 = vmatprep.subr.mxu0 0.0
    %104 = vmatpush2.msra.mxu0 0.0
    %105 = vmatprep.subr.mxu0 0.0
    %106 = vmatpush2.msra.mxu0 0.0
    %107 = vmatprep.subr.mxu0 0.0
    %108 = vmatpush2.msra.mxu0 0.0
    %109 = vmatprep.subr.mxu0 0.0
    %110 = vmatpush2.msra.mxu0 0.0
    %111 = vmatprep.subr.mxu0 0.0
    %112 = vmatpush2.msra.mxu0 0.0
    %113 = vmatprep.subr.mxu0 0.0
    %114 = vmatpush2.msra.mxu0 0.0
    %115 = vmatprep.subr.mxu0 0.0
    %116 = vmatpush2.msra.mxu0 0.0
    %117 = vmatprep.subr.mxu0 0.0
    %118 = vmatpush2.msra.mxu0 0.0
    %119 = vmatprep.subr.mxu0 0.0
    %120 = vmatpush2.msra.mxu0 0.0
    %121 = vmatprep.subr.mxu0 0.0
    %122 = vmatpush2.msra.mxu0 0.0
    %123 = vmatprep.subr.mxu0 0.0
    %124 = vmatpush2.msra.mxu0 0.0
    %125 = vmatprep.subr.mxu0 0.0
    %126 = vmatpush2.msra.mxu0 0.0
    %127 = vmatprep.subr.mxu0 0.0
    %128 = vmatpush2.msra.mxu0 0.0
    %129 = vmatprep.subr.mxu0 0.0
    %130 = vmatpush2.msra.mxu0 0.0
    %131 = vmatprep.mubr.f32.mxu0 0.0
    %132 = vmatmul.mubr.f32.gmra.mxu0 %v65
    %v133 = vpop.f32.mrf.mxu0
    %v134 = vadd.f32 0.0, %v133
    %v135 = vpop.f32.mrf.mxu0
    %136 = vdwg.mxu0
    %v137 = vadd.f32 %v62, %v134
    %v138 = vxor.u32 %v137, 2147483648
    %v139 = vmul.f32 %v138, 1.442695
    %v140 = vpow.pop %v139
    %v141 = vadd.f32 %v140, 1.0
    %v142 = vrcp.pop %v141
    %v143 = vmul.f32 1.0, %v142
    %v144 = vtanh.pop %v137
    %v145 = vmul.f32 %v143, 0.0
    %147 = vrot.lane.b32.xlu0 %v144, 64
    %v148 = vpop.permute.xlu0 %147
    %v150 = vmul.f32 %v143, %v148
    %152 = vrot.lane.b32.xlu0 %v150, 32
    %v153 = vpop.permute.xlu0 %152
    %v155 = vadd.f32 %v145, %v153
    %v156 = vtanh.pop %v155
    %158 = vrot.lane.b32.xlu0 %v156, 64
    %v159 = vpop.permute.xlu0 %158
    %v161 = vmul.f32 %v143, %v159
    %s162 = sld [smem:[#allocation2 + $0x80]]
    %s163 = scalar_lea.vmem %s1, %s162
    %v164 = vld [vmem:[%s163] sm:$0x1]
    %v166 = vlaneseq
    %v167 = vshrl.u32 %v166, 7
    %v168 = vsub.s32 0, %v167
    %v169 = vrot.slane %v164, %v168
    %v171 = vsel %vm41, %v169, 0.0
    %s172 = sld [smem:[#allocation2 + $0x81]]
    %s173 = scalar_lea.vmem %s1, %s172
    %v174 = vld [vmem:[%s173] sm:$0x1]
    %v176 = vlaneseq
    %v177 = vshrl.u32 %v176, 7
    %v178 = vsub.s32 0, %v177
    %v179 = vrot.slane %v174, %v178
    %v181 = vsel %vm42, %v179, %v171
    %183 = vrot.lane.b32.xlu0 %v161, 32
    %v184 = vpop.permute.xlu0 %183
    %v185 = vsel %vm63, %v184, 0
    %187 = vmatprep.subr.mxu0 0.0
    %188 = vmatpush1.msra.mxu0 0.0
    %189 = vmatprep.subr.mxu0 0.0
    %190 = vmatpush1.msra.mxu0 0.0
    %191 = vmatprep.subr.mxu0 0.0
    %192 = vmatpush1.msra.mxu0 0.0
    %193 = vmatprep.subr.mxu0 0.0
    %194 = vmatpush1.msra.mxu0 0.0
    %195 = vmatprep.subr.mxu0 0.0
    %196 = vmatpush1.msra.mxu0 0.0
    %197 = vmatprep.subr.mxu0 0.0
    %198 = vmatpush1.msra.mxu0 0.0
    %199 = vmatprep.subr.mxu0 0.0
    %200 = vmatpush1.msra.mxu0 0.0
    %201 = vmatprep.subr.mxu0 0.0
    %202 = vmatpush1.msra.mxu0 0.0
    %203 = vmatprep.subr.mxu0 0.0
    %204 = vmatpush1.msra.mxu0 0.0
    %205 = vmatprep.subr.mxu0 0.0
    %206 = vmatpush1.msra.mxu0 0.0
    %207 = vmatprep.subr.mxu0 0.0
    %208 = vmatpush1.msra.mxu0 0.0
    %209 = vmatprep.subr.mxu0 0.0
    %210 = vmatpush1.msra.mxu0 0.0
    %211 = vmatprep.subr.mxu0 0.0
    %212 = vmatpush1.msra.mxu0 %v38
    %213 = vmatprep.subr.mxu0 0.0
    %214 = vmatpush1.msra.mxu0 %v37
    %215 = vmatprep.subr.mxu0 0.0
    %216 = vmatpush1.msra.mxu0 %v36
    %217 = vmatprep.subr.mxu0 0.0
    %218 = vmatpush1.msra.mxu0 %v35
    %219 = vmatprep.subr.mxu0 0.0
    %220 = vmatpush2.msra.mxu0 0.0
    %221 = vmatprep.subr.mxu0 0.0
    %222 = vmatpush2.msra.mxu0 0.0
    %223 = vmatprep.subr.mxu0 0.0
    %224 = vmatpush2.msra.mxu0 0.0
    %225 = vmatprep.subr.mxu0 0.0
    %226 = vmatpush2.msra.mxu0 0.0
    %227 = vmatprep.subr.mxu0 0.0
    %228 = vmatpush2.msra.mxu0 0.0
    %229 = vmatprep.subr.mxu0 0.0
    %230 = vmatpush2.msra.mxu0 0.0
    %231 = vmatprep.subr.mxu0 0.0
    %232 = vmatpush2.msra.mxu0 0.0
    %233 = vmatprep.subr.mxu0 0.0
    %234 = vmatpush2.msra.mxu0 0.0
    %235 = vmatprep.subr.mxu0 0.0
    %236 = vmatpush2.msra.mxu0 0.0
    %237 = vmatprep.subr.mxu0 0.0
    %238 = vmatpush2.msra.mxu0 0.0
    %239 = vmatprep.subr.mxu0 0.0
    %240 = vmatpush2.msra.mxu0 0.0
    %241 = vmatprep.subr.mxu0 0.0
    %242 = vmatpush2.msra.mxu0 0.0
    %243 = vmatprep.subr.mxu0 0.0
    %244 = vmatpush2.msra.mxu0 0.0
    %245 = vmatprep.subr.mxu0 0.0
    %246 = vmatpush2.msra.mxu0 0.0
    %247 = vmatprep.subr.mxu0 0.0
    %248 = vmatpush2.msra.mxu0 0.0
    %249 = vmatprep.subr.mxu0 0.0
    %250 = vmatpush2.msra.mxu0 0.0
    %251 = vmatprep.mubr.f32.mxu0 0.0
    %252 = vmatmul.mubr.f32.gmra.mxu0 %v185
    %v253 = vpop.f32.mrf.mxu0
    %v254 = vadd.f32 0.0, %v253
    %v255 = vpop.f32.mrf.mxu0
    %256 = vdwg.mxu0
    %v257 = vadd.f32 %v181, %v254
    %v258 = vxor.u32 %v257, 2147483648
    %v259 = vmul.f32 %v258, 1.442695
    %v260 = vpow.pop %v259
    %v261 = vadd.f32 %v260, 1.0
    %v262 = vrcp.pop %v261
    %v263 = vmul.f32 1.0, %v262
    %v264 = vtanh.pop %v257
    %v265 = vmul.f32 %v263, %v155
    %267 = vrot.lane.b32.xlu0 %v264, 64
    %v268 = vpop.permute.xlu0 %267
    %v270 = vmul.f32 %v263, %v268
    %272 = vrot.lane.b32.xlu0 %v270, 32
    %v273 = vpop.permute.xlu0 %272
    %v275 = vadd.f32 %v265, %v273
    %v276 = vtanh.pop %v275
    %278 = vrot.lane.b32.xlu0 %v276, 64
    %v279 = vpop.permute.xlu0 %278
    %v281 = vmul.f32 %v263, %v279
    %s282 = sld [smem:[#allocation2 + $0x100]]
    %s283 = scalar_lea.vmem %s1, %s282
    %v284 = vld [vmem:[%s283] sm:$0x1]
    %v286 = vlaneseq
    %v287 = vshrl.u32 %v286, 7
    %v288 = vsub.s32 0, %v287
    %v289 = vrot.slane %v284, %v288
    %v291 = vsel %vm41, %v289, 0.0
    %s292 = sld [smem:[#allocation2 + $0x101]]
    %s293 = scalar_lea.vmem %s1, %s292
    %v294 = vld [vmem:[%s293] sm:$0x1]
    %v296 = vlaneseq
    %v297 = vshrl.u32 %v296, 7
    %v298 = vsub.s32 0, %v297
    %v299 = vrot.slane %v294, %v298
    %v301 = vsel %vm42, %v299, %v291
    %303 = vrot.lane.b32.xlu0 %v281, 32
    %v304 = vpop.permute.xlu0 %303
    %v305 = vsel %vm63, %v304, 0
    %307 = vmatprep.subr.mxu0 0.0
    %308 = vmatpush1.msra.mxu0 0.0
    %309 = vmatprep.subr.mxu0 0.0
    %310 = vmatpush1.msra.mxu0 0.0
    %311 = vmatprep.subr.mxu0 0.0
    %312 = vmatpush1.msra.mxu0 0.0
    %313 = vmatprep.subr.mxu0 0.0
    %314 = vmatpush1.msra.mxu0 0.0
    %315 = vmatprep.subr.mxu0 0.0
    %316 = vmatpush1.msra.mxu0 0.0
    %317 = vmatprep.subr.mxu0 0.0
    %318 = vmatpush1.msra.mxu0 0.0
    %319 = vmatprep.subr.mxu0 0.0
    %320 = vmatpush1.msra.mxu0 0.0
    %321 = vmatprep.subr.mxu0 0.0
    %322 = vmatpush1.msra.mxu0 0.0
    %323 = vmatprep.subr.mxu0 0.0
    %324 = vmatpush1.msra.mxu0 0.0
    %325 = vmatprep.subr.mxu0 0.0
    %326 = vmatpush1.msra.mxu0 0.0
    %327 = vmatprep.subr.mxu0 0.0
    %328 = vmatpush1.msra.mxu0 0.0
    %329 = vmatprep.subr.mxu0 0.0
    %330 = vmatpush1.msra.mxu0 0.0
    %331 = vmatprep.subr.mxu0 0.0
    %332 = vmatpush1.msra.mxu0 %v38
    %333 = vmatprep.subr.mxu0 0.0
    %334 = vmatpush1.msra.mxu0 %v37
    %335 = vmatprep.subr.mxu0 0.0
    %336 = vmatpush1.msra.mxu0 %v36
    %337 = vmatprep.subr.mxu0 0.0
    %338 = vmatpush1.msra.mxu0 %v35
    %339 = vmatprep.subr.mxu0 0.0
    %340 = vmatpush2.msra.mxu0 0.0
    %341 = vmatprep.subr.mxu0 0.0
    %342 = vmatpush2.msra.mxu0 0.0
    %343 = vmatprep.subr.mxu0 0.0
    %344 = vmatpush2.msra.mxu0 0.0
    %345 = vmatprep.subr.mxu0 0.0
    %346 = vmatpush2.msra.mxu0 0.0
    %347 = vmatprep.subr.mxu0 0.0
    %348 = vmatpush2.msra.mxu0 0.0
    %349 = vmatprep.subr.mxu0 0.0
    %350 = vmatpush2.msra.mxu0 0.0
    %351 = vmatprep.subr.mxu0 0.0
    %352 = vmatpush2.msra.mxu0 0.0
    %353 = vmatprep.subr.mxu0 0.0
    %354 = vmatpush2.msra.mxu0 0.0
    %355 = vmatprep.subr.mxu0 0.0
    %356 = vmatpush2.msra.mxu0 0.0
    %357 = vmatprep.subr.mxu0 0.0
    %358 = vmatpush2.msra.mxu0 0.0
    %359 = vmatprep.subr.mxu0 0.0
    %360 = vmatpush2.msra.mxu0 0.0
    %361 = vmatprep.subr.mxu0 0.0
    %362 = vmatpush2.msra.mxu0 0.0
    %363 = vmatprep.subr.mxu0 0.0
    %364 = vmatpush2.msra.mxu0 0.0
    %365 = vmatprep.subr.mxu0 0.0
    %366 = vmatpush2.msra.mxu0 0.0
    %367 = vmatprep.subr.mxu0 0.0
    %368 = vmatpush2.msra.mxu0 0.0
    %369 = vmatprep.subr.mxu0 0.0
    %370 = vmatpush2.msra.mxu0 0.0
    %371 = vmatprep.mubr.f32.mxu0 0.0
    %372 = vmatmul.mubr.f32.gmra.mxu0 %v305
    %v373 = vpop.f32.mrf.mxu0
    %v374 = vadd.f32 0.0, %v373
    %v375 = vpop.f32.mrf.mxu0
    %376 = vdwg.mxu0
    %v377 = vadd.f32 %v301, %v374
    %v378 = vxor.u32 %v377, 2147483648
    %v379 = vmul.f32 %v378, 1.442695
    %v380 = vpow.pop %v379
    %v381 = vadd.f32 %v380, 1.0
    %v382 = vrcp.pop %v381
    %v383 = vmul.f32 1.0, %v382
    %v384 = vtanh.pop %v377
    %v385 = vmul.f32 %v383, %v275
    %387 = vrot.lane.b32.xlu0 %v384, 64
    %v388 = vpop.permute.xlu0 %387
    %v390 = vmul.f32 %v383, %v388
    %392 = vrot.lane.b32.xlu0 %v390, 32
    %v393 = vpop.permute.xlu0 %392
    %v395 = vadd.f32 %v385, %v393
    %v396 = vtanh.pop %v395
    %398 = vrot.lane.b32.xlu0 %v396, 64
    %v399 = vpop.permute.xlu0 %398
    %v401 = vmul.f32 %v383, %v399
    %s402 = sld [smem:[#allocation2 + $0x180]]
    %s403 = scalar_lea.vmem %s1, %s402
    %v404 = vld [vmem:[%s403] sm:$0x1]
    %v406 = vlaneseq
    %v407 = vshrl.u32 %v406, 7
    %v408 = vsub.s32 0, %v407
    %v409 = vrot.slane %v404, %v408
    %v411 = vsel %vm41, %v409, 0.0
    %s412 = sld [smem:[#allocation2 + $0x181]]
    %s413 = scalar_lea.vmem %s1, %s412
    %v414 = vld [vmem:[%s413] sm:$0x1]
    %v416 = vlaneseq
    %v417 = vshrl.u32 %v416, 7
    %v418 = vsub.s32 0, %v417
    %v419 = vrot.slane %v414, %v418
    %v421 = vsel %vm42, %v419, %v411
    %423 = vrot.lane.b32.xlu0 %v401, 32
    %v424 = vpop.permute.xlu0 %423
    %v425 = vsel %vm63, %v424, 0
    %427 = vmatprep.subr.mxu0 0.0
    %428 = vmatpush1.msra.mxu0 0.0
    %429 = vmatprep.subr.mxu0 0.0
    %430 = vmatpush1.msra.mxu0 0.0
    %431 = vmatprep.subr.mxu0 0.0
    %432 = vmatpush1.msra.mxu0 0.0
    %433 = vmatprep.subr.mxu0 0.0
    %434 = vmatpush1.msra.mxu0 0.0
    %435 = vmatprep.subr.mxu0 0.0
    %436 = vmatpush1.msra.mxu0 0.0
    %437 = vmatprep.subr.mxu0 0.0
    %438 = vmatpush1.msra.mxu0 0.0
    %439 = vmatprep.subr.mxu0 0.0
    %440 = vmatpush1.msra.mxu0 0.0
    %441 = vmatprep.subr.mxu0 0.0
    %442 = vmatpush1.msra.mxu0 0.0
    %443 = vmatprep.subr.mxu0 0.0
    %444 = vmatpush1.msra.mxu0 0.0
    %445 = vmatprep.subr.mxu0 0.0
    %446 = vmatpush1.msra.mxu0 0.0
    %447 = vmatprep.subr.mxu0 0.0
    %448 = vmatpush1.msra.mxu0 0.0
    %449 = vmatprep.subr.mxu0 0.0
    %450 = vmatpush1.msra.mxu0 0.0
    %451 = vmatprep.subr.mxu0 0.0
    %452 = vmatpush1.msra.mxu0 %v38
    %453 = vmatprep.subr.mxu0 0.0
    %454 = vmatpush1.msra.mxu0 %v37
    %455 = vmatprep.subr.mxu0 0.0
    %456 = vmatpush1.msra.mxu0 %v36
    %457 = vmatprep.subr.mxu0 0.0
    %458 = vmatpush1.msra.mxu0 %v35
    %459 = vmatprep.subr.mxu0 0.0
    %460 = vmatpush2.msra.mxu0 0.0
    %461 = vmatprep.subr.mxu0 0.0
    %462 = vmatpush2.msra.mxu0 0.0
    %463 = vmatprep.subr.mxu0 0.0
    %464 = vmatpush2.msra.mxu0 0.0
    %465 = vmatprep.subr.mxu0 0.0
    %466 = vmatpush2.msra.mxu0 0.0
    %467 = vmatprep.subr.mxu0 0.0
    %468 = vmatpush2.msra.mxu0 0.0
    %469 = vmatprep.subr.mxu0 0.0
    %470 = vmatpush2.msra.mxu0 0.0
    %471 = vmatprep.subr.mxu0 0.0
    %472 = vmatpush2.msra.mxu0 0.0
    %473 = vmatprep.subr.mxu0 0.0
    %474 = vmatpush2.msra.mxu0 0.0
    %475 = vmatprep.subr.mxu0 0.0
    %476 = vmatpush2.msra.mxu0 0.0
    %477 = vmatprep.subr.mxu0 0.0
    %478 = vmatpush2.msra.mxu0 0.0
    %479 = vmatprep.subr.mxu0 0.0
    %480 = vmatpush2.msra.mxu0 0.0
    %481 = vmatprep.subr.mxu0 0.0
    %482 = vmatpush2.msra.mxu0 0.0
    %483 = vmatprep.subr.mxu0 0.0
    %484 = vmatpush2.msra.mxu0 0.0
    %485 = vmatprep.subr.mxu0 0.0
    %486 = vmatpush2.msra.mxu0 0.0
    %487 = vmatprep.subr.mxu0 0.0
    %488 = vmatpush2.msra.mxu0 0.0
    %489 = vmatprep.subr.mxu0 0.0
    %490 = vmatpush2.msra.mxu0 0.0
    %491 = vmatprep.mubr.f32.mxu0 0.0
    %492 = vmatmul.mubr.f32.gmra.mxu0 %v425
    %v493 = vpop.f32.mrf.mxu0
    %v494 = vadd.f32 0.0, %v493
    %v495 = vpop.f32.mrf.mxu0
    %496 = vdwg.mxu0
    %v497 = vadd.f32 %v421, %v494
    %v498 = vxor.u32 %v497, 2147483648
    %v499 = vmul.f32 %v498, 1.442695
    %v500 = vpow.pop %v499
    %v501 = vadd.f32 %v500, 1.0
    %v502 = vrcp.pop %v501
    %v503 = vmul.f32 1.0, %v502
    %v504 = vtanh.pop %v497
    %v505 = vmul.f32 %v503, %v395
    %507 = vrot.lane.b32.xlu0 %v504, 64
    %v508 = vpop.permute.xlu0 %507
    %v510 = vmul.f32 %v503, %v508
    %512 = vrot.lane.b32.xlu0 %v510, 32
    %v513 = vpop.permute.xlu0 %512
    %v515 = vadd.f32 %v505, %v513
    %v516 = vtanh.pop %v515
    %518 = vrot.lane.b32.xlu0 %v516, 64
    %v519 = vpop.permute.xlu0 %518
    %v521 = vmul.f32 %v503, %v519
    %s522 = sld [smem:[#allocation2 + $0x200]]
    %s523 = scalar_lea.vmem %s1, %s522
    %v524 = vld [vmem:[%s523] sm:$0x1]
    %v526 = vlaneseq
    %v527 = vshrl.u32 %v526, 7
    %v528 = vsub.s32 0, %v527
    %v529 = vrot.slane %v524, %v528
    %v531 = vsel %vm41, %v529, 0.0
    %s532 = sld [smem:[#allocation2 + $0x201]]
    %s533 = scalar_lea.vmem %s1, %s532
    %v534 = vld [vmem:[%s533] sm:$0x1]
    %v536 = vlaneseq
    %v537 = vshrl.u32 %v536, 7
    %v538 = vsub.s32 0, %v537
    %v539 = vrot.slane %v534, %v538
    %v541 = vsel %vm42, %v539, %v531
    %543 = vrot.lane.b32.xlu0 %v521, 32
    %v544 = vpop.permute.xlu0 %543
    %v545 = vsel %vm63, %v544, 0
    %547 = vmatprep.subr.mxu0 0.0
    %548 = vmatpush1.msra.mxu0 0.0
    %549 = vmatprep.subr.mxu0 0.0
    %550 = vmatpush1.msra.mxu0 0.0
    %551 = vmatprep.subr.mxu0 0.0
    %552 = vmatpush1.msra.mxu0 0.0
    %553 = vmatprep.subr.mxu0 0.0
    %554 = vmatpush1.msra.mxu0 0.0
    %555 = vmatprep.subr.mxu0 0.0
    %556 = vmatpush1.msra.mxu0 0.0
    %557 = vmatprep.subr.mxu0 0.0
    %558 = vmatpush1.msra.mxu0 0.0
    %559 = vmatprep.subr.mxu0 0.0
    %560 = vmatpush1.msra.mxu0 0.0
    %561 = vmatprep.subr.mxu0 0.0
    %562 = vmatpush1.msra.mxu0 0.0
    %563 = vmatprep.subr.mxu0 0.0
    %564 = vmatpush1.msra.mxu0 0.0
    %565 = vmatprep.subr.mxu0 0.0
    %566 = vmatpush1.msra.mxu0 0.0
    %567 = vmatprep.subr.mxu0 0.0
    %568 = vmatpush1.msra.mxu0 0.0
    %569 = vmatprep.subr.mxu0 0.0
    %570 = vmatpush1.msra.mxu0 0.0
    %571 = vmatprep.subr.mxu0 0.0
    %572 = vmatpush1.msra.mxu0 %v38
    %573 = vmatprep.subr.mxu0 0.0
    %574 = vmatpush1.msra.mxu0 %v37
    %575 = vmatprep.subr.mxu0 0.0
    %576 = vmatpush1.msra.mxu0 %v36
    %577 = vmatprep.subr.mxu0 0.0
    %578 = vmatpush1.msra.mxu0 %v35
    %579 = vmatprep.subr.mxu0 0.0
    %580 = vmatpush2.msra.mxu0 0.0
    %581 = vmatprep.subr.mxu0 0.0
    %582 = vmatpush2.msra.mxu0 0.0
    %583 = vmatprep.subr.mxu0 0.0
    %584 = vmatpush2.msra.mxu0 0.0
    %585 = vmatprep.subr.mxu0 0.0
    %586 = vmatpush2.msra.mxu0 0.0
    %587 = vmatprep.subr.mxu0 0.0
    %588 = vmatpush2.msra.mxu0 0.0
    %589 = vmatprep.subr.mxu0 0.0
    %590 = vmatpush2.msra.mxu0 0.0
    %591 = vmatprep.subr.mxu0 0.0
    %592 = vmatpush2.msra.mxu0 0.0
    %593 = vmatprep.subr.mxu0 0.0
    %594 = vmatpush2.msra.mxu0 0.0
    %595 = vmatprep.subr.mxu0 0.0
    %596 = vmatpush2.msra.mxu0 0.0
    %597 = vmatprep.subr.mxu0 0.0
    %598 = vmatpush2.msra.mxu0 0.0
    %599 = vmatprep.subr.mxu0 0.0
    %600 = vmatpush2.msra.mxu0 0.0
    %601 = vmatprep.subr.mxu0 0.0
    %602 = vmatpush2.msra.mxu0 0.0
    %603 = vmatprep.subr.mxu0 0.0
    %604 = vmatpush2.msra.mxu0 0.0
    %605 = vmatprep.subr.mxu0 0.0
    %606 = vmatpush2.msra.mxu0 0.0
    %607 = vmatprep.subr.mxu0 0.0
    %608 = vmatpush2.msra.mxu0 0.0
    %609 = vmatprep.subr.mxu0 0.0
    %610 = vmatpush2.msra.mxu0 0.0
    %611 = vmatprep.mubr.f32.mxu0 0.0
    %612 = vmatmul.mubr.f32.gmra.mxu0 %v545
    %v613 = vpop.f32.mrf.mxu0
    %v614 = vadd.f32 0.0, %v613
    %v615 = vpop.f32.mrf.mxu0
    %616 = vdwg.mxu0
    %v617 = vadd.f32 %v541, %v614
    %v618 = vxor.u32 %v617, 2147483648
    %v619 = vmul.f32 %v618, 1.442695
    %v620 = vpow.pop %v619
    %v621 = vadd.f32 %v620, 1.0
    %v622 = vrcp.pop %v621
    %v623 = vmul.f32 1.0, %v622
    %v624 = vtanh.pop %v617
    %v625 = vmul.f32 %v623, %v515
    %627 = vrot.lane.b32.xlu0 %v624, 64
    %v628 = vpop.permute.xlu0 %627
    %v630 = vmul.f32 %v623, %v628
    %632 = vrot.lane.b32.xlu0 %v630, 32
    %v633 = vpop.permute.xlu0 %632
    %v635 = vadd.f32 %v625, %v633
    %v636 = vtanh.pop %v635
    %638 = vrot.lane.b32.xlu0 %v636, 64
    %v639 = vpop.permute.xlu0 %638
    %v641 = vmul.f32 %v623, %v639
    %s642 = sld [smem:[#allocation2 + $0x280]]
    %s643 = scalar_lea.vmem %s1, %s642
    %v644 = vld [vmem:[%s643] sm:$0x1]
    %v646 = vlaneseq
    %v647 = vshrl.u32 %v646, 7
    %v648 = vsub.s32 0, %v647
    %v649 = vrot.slane %v644, %v648
    %v651 = vsel %vm41, %v649, 0.0
    %s652 = sld [smem:[#allocation2 + $0x281]]
    %s653 = scalar_lea.vmem %s1, %s652
    %v654 = vld [vmem:[%s653] sm:$0x1]
    %v656 = vlaneseq
    %v657 = vshrl.u32 %v656, 7
    %v658 = vsub.s32 0, %v657
    %v659 = vrot.slane %v654, %v658
    %v661 = vsel %vm42, %v659, %v651
    %663 = vrot.lane.b32.xlu0 %v641, 32
    %v664 = vpop.permute.xlu0 %663
    %v665 = vsel %vm63, %v664, 0
    %667 = vmatprep.subr.mxu0 0.0
    %668 = vmatpush1.msra.mxu0 0.0
    %669 = vmatprep.subr.mxu0 0.0
    %670 = vmatpush1.msra.mxu0 0.0
    %671 = vmatprep.subr.mxu0 0.0
    %672 = vmatpush1.msra.mxu0 0.0
    %673 = vmatprep.subr.mxu0 0.0
    %674 = vmatpush1.msra.mxu0 0.0
    %675 = vmatprep.subr.mxu0 0.0
    %676 = vmatpush1.msra.mxu0 0.0
    %677 = vmatprep.subr.mxu0 0.0
    %678 = vmatpush1.msra.mxu0 0.0
    %679 = vmatprep.subr.mxu0 0.0
    %680 = vmatpush1.msra.mxu0 0.0
    %681 = vmatprep.subr.mxu0 0.0
    %682 = vmatpush1.msra.mxu0 0.0
    %683 = vmatprep.subr.mxu0 0.0
    %684 = vmatpush1.msra.mxu0 0.0
    %685 = vmatprep.subr.mxu0 0.0
    %686 = vmatpush1.msra.mxu0 0.0
    %687 = vmatprep.subr.mxu0 0.0
    %688 = vmatpush1.msra.mxu0 0.0
    %689 = vmatprep.subr.mxu0 0.0
    %690 = vmatpush1.msra.mxu0 0.0
    %691 = vmatprep.subr.mxu0 0.0
    %692 = vmatpush1.msra.mxu0 %v38
    %693 = vmatprep.subr.mxu0 0.0
    %694 = vmatpush1.msra.mxu0 %v37
    %695 = vmatprep.subr.mxu0 0.0
    %696 = vmatpush1.msra.mxu0 %v36
    %697 = vmatprep.subr.mxu0 0.0
    %698 = vmatpush1.msra.mxu0 %v35
    %699 = vmatprep.subr.mxu0 0.0
    %700 = vmatpush2.msra.mxu0 0.0
    %701 = vmatprep.subr.mxu0 0.0
    %702 = vmatpush2.msra.mxu0 0.0
    %703 = vmatprep.subr.mxu0 0.0
    %704 = vmatpush2.msra.mxu0 0.0
    %705 = vmatprep.subr.mxu0 0.0
    %706 = vmatpush2.msra.mxu0 0.0
    %707 = vmatprep.subr.mxu0 0.0
    %708 = vmatpush2.msra.mxu0 0.0
    %709 = vmatprep.subr.mxu0 0.0
    %710 = vmatpush2.msra.mxu0 0.0
    %711 = vmatprep.subr.mxu0 0.0
    %712 = vmatpush2.msra.mxu0 0.0
    %713 = vmatprep.subr.mxu0 0.0
    %714 = vmatpush2.msra.mxu0 0.0
    %715 = vmatprep.subr.mxu0 0.0
    %716 = vmatpush2.msra.mxu0 0.0
    %717 = vmatprep.subr.mxu0 0.0
    %718 = vmatpush2.msra.mxu0 0.0
    %719 = vmatprep.subr.mxu0 0.0
    %720 = vmatpush2.msra.mxu0 0.0
    %721 = vmatprep.subr.mxu0 0.0
    %722 = vmatpush2.msra.mxu0 0.0
    %723 = vmatprep.subr.mxu0 0.0
    %724 = vmatpush2.msra.mxu0 0.0
    %725 = vmatprep.subr.mxu0 0.0
    %726 = vmatpush2.msra.mxu0 0.0
    %727 = vmatprep.subr.mxu0 0.0
    %728 = vmatpush2.msra.mxu0 0.0
    %729 = vmatprep.subr.mxu0 0.0
    %730 = vmatpush2.msra.mxu0 0.0
    %731 = vmatprep.mubr.f32.mxu0 0.0
    %732 = vmatmul.mubr.f32.gmra.mxu0 %v665
    %v733 = vpop.f32.mrf.mxu0
    %v734 = vadd.f32 0.0, %v733
    %v735 = vpop.f32.mrf.mxu0
    %736 = vdwg.mxu0
    %v737 = vadd.f32 %v661, %v734
    %v738 = vxor.u32 %v737, 2147483648
    %v739 = vmul.f32 %v738, 1.442695
    %v740 = vpow.pop %v739
    %v741 = vadd.f32 %v740, 1.0
    %v742 = vrcp.pop %v741
    %v743 = vmul.f32 1.0, %v742
    %v744 = vtanh.pop %v737
    %v745 = vmul.f32 %v743, %v635
    %747 = vrot.lane.b32.xlu0 %v744, 64
    %v748 = vpop.permute.xlu0 %747
    %v750 = vmul.f32 %v743, %v748
    %752 = vrot.lane.b32.xlu0 %v750, 32
    %v753 = vpop.permute.xlu0 %752
    %v755 = vadd.f32 %v745, %v753
    %v756 = vtanh.pop %v755
    %758 = vrot.lane.b32.xlu0 %v756, 64
    %v759 = vpop.permute.xlu0 %758
    %v761 = vmul.f32 %v743, %v759
    %s762 = sld [smem:[#allocation2 + $0x300]]
    %s763 = scalar_lea.vmem %s1, %s762
    %v764 = vld [vmem:[%s763] sm:$0x1]
    %v766 = vlaneseq
    %v767 = vshrl.u32 %v766, 7
    %v768 = vsub.s32 0, %v767
    %v769 = vrot.slane %v764, %v768
    %v771 = vsel %vm41, %v769, 0.0
    %s772 = sld [smem:[#allocation2 + $0x301]]
    %s773 = scalar_lea.vmem %s1, %s772
    %v774 = vld [vmem:[%s773] sm:$0x1]
    %v776 = vlaneseq
    %v777 = vshrl.u32 %v776, 7
    %v778 = vsub.s32 0, %v777
    %v779 = vrot.slane %v774, %v778
    %v781 = vsel %vm42, %v779, %v771
    %783 = vrot.lane.b32.xlu0 %v761, 32
    %v784 = vpop.permute.xlu0 %783
    %v785 = vsel %vm63, %v784, 0
    %787 = vmatprep.subr.mxu0 0.0
    %788 = vmatpush1.msra.mxu0 0.0
    %789 = vmatprep.subr.mxu0 0.0
    %790 = vmatpush1.msra.mxu0 0.0
    %791 = vmatprep.subr.mxu0 0.0
    %792 = vmatpush1.msra.mxu0 0.0
    %793 = vmatprep.subr.mxu0 0.0
    %794 = vmatpush1.msra.mxu0 0.0
    %795 = vmatprep.subr.mxu0 0.0
    %796 = vmatpush1.msra.mxu0 0.0
    %797 = vmatprep.subr.mxu0 0.0
    %798 = vmatpush1.msra.mxu0 0.0
    %799 = vmatprep.subr.mxu0 0.0
    %800 = vmatpush1.msra.mxu0 0.0
    %801 = vmatprep.subr.mxu0 0.0
    %802 = vmatpush1.msra.mxu0 0.0
    %803 = vmatprep.subr.mxu0 0.0
    %804 = vmatpush1.msra.mxu0 0.0
    %805 = vmatprep.subr.mxu0 0.0
    %806 = vmatpush1.msra.mxu0 0.0
    %807 = vmatprep.subr.mxu0 0.0
    %808 = vmatpush1.msra.mxu0 0.0
    %809 = vmatprep.subr.mxu0 0.0
    %810 = vmatpush1.msra.mxu0 0.0
    %811 = vmatprep.subr.mxu0 0.0
    %812 = vmatpush1.msra.mxu0 %v38
    %813 = vmatprep.subr.mxu0 0.0
    %814 = vmatpush1.msra.mxu0 %v37
    %815 = vmatprep.subr.mxu0 0.0
    %816 = vmatpush1.msra.mxu0 %v36
    %817 = vmatprep.subr.mxu0 0.0
    %818 = vmatpush1.msra.mxu0 %v35
    %819 = vmatprep.subr.mxu0 0.0
    %820 = vmatpush2.msra.mxu0 0.0
    %821 = vmatprep.subr.mxu0 0.0
    %822 = vmatpush2.msra.mxu0 0.0
    %823 = vmatprep.subr.mxu0 0.0
    %824 = vmatpush2.msra.mxu0 0.0
    %825 = vmatprep.subr.mxu0 0.0
    %826 = vmatpush2.msra.mxu0 0.0
    %827 = vmatprep.subr.mxu0 0.0
    %828 = vmatpush2.msra.mxu0 0.0
    %829 = vmatprep.subr.mxu0 0.0
    %830 = vmatpush2.msra.mxu0 0.0
    %831 = vmatprep.subr.mxu0 0.0
    %832 = vmatpush2.msra.mxu0 0.0
    %833 = vmatprep.subr.mxu0 0.0
    %834 = vmatpush2.msra.mxu0 0.0
    %835 = vmatprep.subr.mxu0 0.0
    %836 = vmatpush2.msra.mxu0 0.0
    %837 = vmatprep.subr.mxu0 0.0
    %838 = vmatpush2.msra.mxu0 0.0
    %839 = vmatprep.subr.mxu0 0.0
    %840 = vmatpush2.msra.mxu0 0.0
    %841 = vmatprep.subr.mxu0 0.0
    %842 = vmatpush2.msra.mxu0 0.0
    %843 = vmatprep.subr.mxu0 0.0
    %844 = vmatpush2.msra.mxu0 0.0
    %845 = vmatprep.subr.mxu0 0.0
    %846 = vmatpush2.msra.mxu0 0.0
    %847 = vmatprep.subr.mxu0 0.0
    %848 = vmatpush2.msra.mxu0 0.0
    %849 = vmatprep.subr.mxu0 0.0
    %850 = vmatpush2.msra.mxu0 0.0
    %851 = vmatprep.mubr.f32.mxu0 0.0
    %852 = vmatmul.mubr.f32.gmra.mxu0 %v785
    %v853 = vpop.f32.mrf.mxu0
    %v854 = vadd.f32 0.0, %v853
    %v855 = vpop.f32.mrf.mxu0
    %856 = vdwg.mxu0
    %v857 = vadd.f32 %v781, %v854
    %v858 = vxor.u32 %v857, 2147483648
    %v859 = vmul.f32 %v858, 1.442695
    %v860 = vpow.pop %v859
    %v861 = vadd.f32 %v860, 1.0
    %v862 = vrcp.pop %v861
    %v863 = vmul.f32 1.0, %v862
    %v864 = vtanh.pop %v857
    %v865 = vmul.f32 %v863, %v755
    %867 = vrot.lane.b32.xlu0 %v864, 64
    %v868 = vpop.permute.xlu0 %867
    %v870 = vmul.f32 %v863, %v868
    %872 = vrot.lane.b32.xlu0 %v870, 32
    %v873 = vpop.permute.xlu0 %872
    %v875 = vadd.f32 %v865, %v873
    %v876 = vtanh.pop %v875
    %878 = vrot.lane.b32.xlu0 %v876, 64
    %v879 = vpop.permute.xlu0 %878
    %v881 = vmul.f32 %v863, %v879
    %s882 = sld [smem:[#allocation2 + $0x380]]
    %s883 = scalar_lea.vmem %s1, %s882
    %v884 = vld [vmem:[%s883] sm:$0x1]
    %v886 = vlaneseq
    %v887 = vshrl.u32 %v886, 7
    %v888 = vsub.s32 0, %v887
    %v889 = vrot.slane %v884, %v888
    %v891 = vsel %vm41, %v889, 0.0
    %s892 = sld [smem:[#allocation2 + $0x381]]
    %s893 = scalar_lea.vmem %s1, %s892
    %v894 = vld [vmem:[%s893] sm:$0x1]
    %v896 = vlaneseq
    %v897 = vshrl.u32 %v896, 7
    %v898 = vsub.s32 0, %v897
    %v899 = vrot.slane %v894, %v898
    %v901 = vsel %vm42, %v899, %v891
    %903 = vrot.lane.b32.xlu0 %v881, 32
    %v904 = vpop.permute.xlu0 %903
    %v905 = vsel %vm63, %v904, 0
    %907 = vmatprep.subr.mxu0 0.0
    %908 = vmatpush1.msra.mxu0 0.0
    %909 = vmatprep.subr.mxu0 0.0
    %910 = vmatpush1.msra.mxu0 0.0
    %911 = vmatprep.subr.mxu0 0.0
    %912 = vmatpush1.msra.mxu0 0.0
    %913 = vmatprep.subr.mxu0 0.0
    %914 = vmatpush1.msra.mxu0 0.0
    %915 = vmatprep.subr.mxu0 0.0
    %916 = vmatpush1.msra.mxu0 0.0
    %917 = vmatprep.subr.mxu0 0.0
    %918 = vmatpush1.msra.mxu0 0.0
    %919 = vmatprep.subr.mxu0 0.0
    %920 = vmatpush1.msra.mxu0 0.0
    %921 = vmatprep.subr.mxu0 0.0
    %922 = vmatpush1.msra.mxu0 0.0
    %923 = vmatprep.subr.mxu0 0.0
    %924 = vmatpush1.msra.mxu0 0.0
    %925 = vmatprep.subr.mxu0 0.0
    %926 = vmatpush1.msra.mxu0 0.0
    %927 = vmatprep.subr.mxu0 0.0
    %928 = vmatpush1.msra.mxu0 0.0
    %929 = vmatprep.subr.mxu0 0.0
    %930 = vmatpush1.msra.mxu0 0.0
    %931 = vmatprep.subr.mxu0 0.0
    %932 = vmatpush1.msra.mxu0 %v38
    %933 = vmatprep.subr.mxu0 0.0
    %934 = vmatpush1.msra.mxu0 %v37
    %935 = vmatprep.subr.mxu0 0.0
    %936 = vmatpush1.msra.mxu0 %v36
    %937 = vmatprep.subr.mxu0 0.0
    %938 = vmatpush1.msra.mxu0 %v35
    %939 = vmatprep.subr.mxu0 0.0
    %940 = vmatpush2.msra.mxu0 0.0
    %941 = vmatprep.subr.mxu0 0.0
    %942 = vmatpush2.msra.mxu0 0.0
    %943 = vmatprep.subr.mxu0 0.0
    %944 = vmatpush2.msra.mxu0 0.0
    %945 = vmatprep.subr.mxu0 0.0
    %946 = vmatpush2.msra.mxu0 0.0
    %947 = vmatprep.subr.mxu0 0.0
    %948 = vmatpush2.msra.mxu0 0.0
    %949 = vmatprep.subr.mxu0 0.0
    %950 = vmatpush2.msra.mxu0 0.0
    %951 = vmatprep.subr.mxu0 0.0
    %952 = vmatpush2.msra.mxu0 0.0
    %953 = vmatprep.subr.mxu0 0.0
    %954 = vmatpush2.msra.mxu0 0.0
    %955 = vmatprep.subr.mxu0 0.0
    %956 = vmatpush2.msra.mxu0 0.0
    %957 = vmatprep.subr.mxu0 0.0
    %958 = vmatpush2.msra.mxu0 0.0
    %959 = vmatprep.subr.mxu0 0.0
    %960 = vmatpush2.msra.mxu0 0.0
    %961 = vmatprep.subr.mxu0 0.0
    %962 = vmatpush2.msra.mxu0 0.0
    %963 = vmatprep.subr.mxu0 0.0
    %964 = vmatpush2.msra.mxu0 0.0
    %965 = vmatprep.subr.mxu0 0.0
    %966 = vmatpush2.msra.mxu0 0.0
    %967 = vmatprep.subr.mxu0 0.0
    %968 = vmatpush2.msra.mxu0 0.0
    %969 = vmatprep.subr.mxu0 0.0
    %970 = vmatpush2.msra.mxu0 0.0
    %971 = vmatprep.mubr.f32.mxu0 0.0
    %972 = vmatmul.mubr.f32.gmra.mxu0 %v905
    %v973 = vpop.f32.mrf.mxu0
    %v974 = vadd.f32 0.0, %v973
    %v975 = vpop.f32.mrf.mxu0
    %976 = vdwg.mxu0
    %v977 = vadd.f32 %v901, %v974
    %v978 = vxor.u32 %v977, 2147483648
    %v979 = vmul.f32 %v978, 1.442695
    %v980 = vpow.pop %v979
    %v981 = vadd.f32 %v980, 1.0
    %v982 = vrcp.pop %v981
    %v983 = vmul.f32 1.0, %v982
    %v984 = vtanh.pop %v977
    %v985 = vmul.f32 %v983, %v875
    %987 = vrot.lane.b32.xlu0 %v984, 64
    %v988 = vpop.permute.xlu0 %987
    %v990 = vmul.f32 %v983, %v988
    %992 = vrot.lane.b32.xlu0 %v990, 32
    %v993 = vpop.permute.xlu0 %992
    %v995 = vadd.f32 %v985, %v993
    %v996 = vtanh.pop %v995
    %998 = vrot.lane.b32.xlu0 %v996, 64
    %v999 = vpop.permute.xlu0 %998
    %v1001 = vmul.f32 %v983, %v999
    %1003 = vrot.lane.b32.xlu0 %v1001, 32
    %v1004 = vpop.permute.xlu0 %1003
    %1006 = vst.msk [vmem:[%s6] sm:$0xff] %vm63, %v1004
    %v1007 = vld [vmem:[%s3] sm:$0xff]
    %v1008 = vld [vmem:[%s3 + $0x8] sm:$0xff]
    %v1009 = vld [vmem:[%s3 + $0x10] sm:$0xff]
    %v1010 = vld [vmem:[%s3 + $0x18] sm:$0xff]
    %v1011 = vld [vmem:[%s4] sm:$0x1]
    %v1013 = vlaneseq
    %v1014 = vshrl.u32 %v1013, 7
    %v1015 = vsub.s32 0, %v1014
    %v1016 = vrot.slane %v1011, %v1015
    %v1018 = vsel %vm63, %v1004, 0
    %1020 = vmatprep.subr.mxu0 0.0
    %1021 = vmatpush1.msra.mxu0 0.0
    %1022 = vmatprep.subr.mxu0 0.0
    %1023 = vmatpush1.msra.mxu0 0.0
    %1024 = vmatprep.subr.mxu0 0.0
    %1025 = vmatpush1.msra.mxu0 0.0
    %1026 = vmatprep.subr.mxu0 0.0
    %1027 = vmatpush1.msra.mxu0 0.0
    %1028 = vmatprep.subr.mxu0 0.0
    %1029 = vmatpush1.msra.mxu0 0.0
    %1030 = vmatprep.subr.mxu0 0.0
    %1031 = vmatpush1.msra.mxu0 0.0
    %1032 = vmatprep.subr.mxu0 0.0
    %1033 = vmatpush1.msra.mxu0 0.0
    %1034 = vmatprep.subr.mxu0 0.0
    %1035 = vmatpush1.msra.mxu0 0.0
    %1036 = vmatprep.subr.mxu0 0.0
    %1037 = vmatpush1.msra.mxu0 0.0
    %1038 = vmatprep.subr.mxu0 0.0
    %1039 = vmatpush1.msra.mxu0 0.0
    %1040 = vmatprep.subr.mxu0 0.0
    %1041 = vmatpush1.msra.mxu0 0.0
    %1042 = vmatprep.subr.mxu0 0.0
    %1043 = vmatpush1.msra.mxu0 0.0
    %1044 = vmatprep.subr.mxu0 0.0
    %1045 = vmatpush1.msra.mxu0 %v1010
    %1046 = vmatprep.subr.mxu0 0.0
    %1047 = vmatpush1.msra.mxu0 %v1009
    %1048 = vmatprep.subr.mxu0 0.0
    %1049 = vmatpush1.msra.mxu0 %v1008
    %1050 = vmatprep.subr.mxu0 0.0
    %1051 = vmatpush1.msra.mxu0 %v1007
    %1052 = vmatprep.subr.mxu0 0.0
    %1053 = vmatpush2.msra.mxu0 0.0
    %1054 = vmatprep.subr.mxu0 0.0
    %1055 = vmatpush2.msra.mxu0 0.0
    %1056 = vmatprep.subr.mxu0 0.0
    %1057 = vmatpush2.msra.mxu0 0.0
    %1058 = vmatprep.subr.mxu0 0.0
    %1059 = vmatpush2.msra.mxu0 0.0
    %1060 = vmatprep.subr.mxu0 0.0
    %1061 = vmatpush2.msra.mxu0 0.0
    %1062 = vmatprep.subr.mxu0 0.0
    %1063 = vmatpush2.msra.mxu0 0.0
    %1064 = vmatprep.subr.mxu0 0.0
    %1065 = vmatpush2.msra.mxu0 0.0
    %1066 = vmatprep.subr.mxu0 0.0
    %1067 = vmatpush2.msra.mxu0 0.0
    %1068 = vmatprep.subr.mxu0 0.0
    %1069 = vmatpush2.msra.mxu0 0.0
    %1070 = vmatprep.subr.mxu0 0.0
    %1071 = vmatpush2.msra.mxu0 0.0
    %1072 = vmatprep.subr.mxu0 0.0
    %1073 = vmatpush2.msra.mxu0 0.0
    %1074 = vmatprep.subr.mxu0 0.0
    %1075 = vmatpush2.msra.mxu0 0.0
    %1076 = vmatprep.subr.mxu0 0.0
    %1077 = vmatpush2.msra.mxu0 0.0
    %1078 = vmatprep.subr.mxu0 0.0
    %1079 = vmatpush2.msra.mxu0 0.0
    %1080 = vmatprep.subr.mxu0 0.0
    %1081 = vmatpush2.msra.mxu0 0.0
    %1082 = vmatprep.subr.mxu0 0.0
    %1083 = vmatpush2.msra.mxu0 0.0
    %1084 = vmatprep.mubr.f32.mxu0 0.0
    %1085 = vmatmul.mubr.f32.gmra.mxu0 %v1018
    %v1086 = vpop.f32.mrf.mxu0
    %v1087 = vadd.f32 %v1016, %v1086
    %v1088 = vpop.f32.mrf.mxu0
    %1089 = vdwg.mxu0
    %1090 = vst [vmem:[%s5] sm:$0xff] %v1087
    // Predicated region
    $region26: #{text_rnn_forward.1} parent=1 // pred_check
      _
    $region27: #{text_rnn_forward.1} parent=1 // pred_check_branch
      %1092 = sbr.rel (0) target = $region29
    $region28: #{text_rnn_forward.1} parent=1 // pred_region
      _
    $region29: #{text_rnn_forward.1} parent=1 // pred_fallthru
      _
    // Predicated region
    $region30: #{text_rnn_forward.1} parent=1 // pred_check
      _
    $region31: #{text_rnn_forward.1} parent=1 // pred_check_branch
      %1094 = sbr.rel (0) target = $region33
    $region32: #{text_rnn_forward.1} parent=1 // pred_region
      _
    $region33: #{text_rnn_forward.1} parent=1 // pred_fallthru
      _
    // Predicated region
    $region34: #{text_rnn_forward.1} parent=1 // pred_check
      _
    $region35: #{text_rnn_forward.1} parent=1 // pred_check_branch
      %1096 = sbr.rel (0) target = $region37
    $region36: #{text_rnn_forward.1} parent=1 // pred_region
      _
    $region37: #{text_rnn_forward.1} parent=1 // pred_fallthru
      _
    // Predicated region
    $region38: #{text_rnn_forward.1} parent=1 // pred_check
      _
    $region39: #{text_rnn_forward.1} parent=1 // pred_check_branch
      %1098 = sbr.rel (0) target = $region41
    $region40: #{text_rnn_forward.1} parent=1 // pred_region
      _
    $region41: #{text_rnn_forward.1} parent=1 // pred_fallthru
      _
    %1099 = vsyncpa [#allocation3], 1

</llo_original>
